<compile_context>
chip_gen: v7x
topology: tpu7x:2x2x1
jax: 0.10.0
libtpu: 0.0.40
codegen_flags: <defaults>
</compile_context>

<pallas_src>
import jax
import jax.numpy as jnp
from jax import lax
from jax.experimental import pallas as pl
from jax.experimental.pallas import tpu as pltpu

# ----- small, module-consistent hyperparameters -----
VOCAB = 100
HIDDEN = 32            # hidden_size == embedding_size (required by the module)
EMB = HIDDEN
NUM_CLASSES = 5
BATCH = 4
SEQ = 8
MAX_POS = 512
TYPE_VOCAB = 2
LN_EPS = 1e-12


def bilstm_kernel(dir_ref,                        # (T*2B, 1) int32: 1 = forward row, 0 = backward row
                  lens_ref,                       # (2B, 1) int32 (lengths duplicated)
                  emb_ref,                        # (T*2B, H) f32 summed embeddings
                  gamma_ref, beta_ref,            # (1, H)
                  wih_ref,                        # (H, 8H)  [W_ih_fwd | W_ih_bwd]  (g cols x2)
                  bih_ref,                        # (1, 8H)  [b_fwd    | b_bwd   ]  (g cols x2)
                  whh_ref,                        # (H, 8H)  [W_hh_fwd | W_hh_bwd]  (g cols x2)
                  wcls_ref, bcls_ref,             # (2H, 128), (1, 128)
                  logits_ref):                    # (2B, 128) out, full-tile store; rows [0,B) valid
    TB2, H = emb_ref.shape
    B2 = logits_ref.shape[0]
    B = B2 // 2
    T = TB2 // B2
    GW = 4 * H                                     # per-direction gate width (i|f|g|o)

    # ---- BertLayerNorm (TF style: eps inside the sqrt), fused into the value chain ----
    x = emb_ref[...]                               # (T*2B, H)
    u = jnp.mean(x, axis=-1, keepdims=True)
    var = jnp.mean((x - u) * (x - u), axis=-1, keepdims=True)
    xln = gamma_ref[...] * ((x - u) * lax.rsqrt(var + LN_EPS)) + beta_ref[...]
    # TODO(synk): dropout(p=0.1) identity (inference mode).

    # ---- hoisted input projection: all timesteps x both directions in ONE matmul ----
    # lanes [0:4H) = x @ W_ih_fwd + b_fwd,  lanes [4H:8H) = x @ W_ih_bwd + b_bwd
    gx = jnp.dot(xln, wih_ref[...], preferred_element_type=jnp.float32) + bih_ref[...]

    # ---- hoisted, loop-invariant direction select -> (T*2B, 4H) ----
    is_fwd_all = dir_ref[...] > 0                  # (T*2B, 1) bool
    gx_sel = jnp.where(is_fwd_all, gx[:, :GW], gx[:, GW:])

    lens = lens_ref[...]                           # (2B, 1) int32
    is_fwd = dir_ref[0:B2, :] > 0                  # (2B, 1): rows 0..B-1 fwd, B..2B-1 bwd

    whh = whh_ref[...]                             # (H, 8H), both directions
    # NOTE: candidate follow-up — latch whh via pltpu.matmul_push_rhs once before the loop
    # if a bundle dump shows a per-step RHS re-push (not applied here, bundle unverified).

    # ---- merged, fully-unrolled bidirectional recurrence; states row-stacked (2B, H) ----
    h = jnp.zeros((B2, H), jnp.float32)
    c = jnp.zeros((B2, H), jnp.float32)
    h_last = jnp.zeros((B2, H), jnp.float32)
    for step in range(T):
        # one 256-wide MXU pass covers both directions' h @ W_hh
        full = jnp.dot(h, whh, preferred_element_type=jnp.float32)      # (2B, 8H)
        rec = jnp.where(is_fwd, full[:, :GW], full[:, GW:])             # vreg-aligned split
        gates = rec + gx_sel[step * B2:(step + 1) * B2, :]              # (2B, 4H) aligned slab
        sig = jax.nn.sigmoid(gates)                 # single full-width EUP issue per step
        i_g = sig[:, 0 * H:1 * H]
        f_g = sig[:, 1 * H:2 * H]
        g_g = 2.0 * sig[:, 2 * H:3 * H] - 1.0       # tanh(x) = 2*sigmoid(2x)-1 (g cols pre-scaled)
        o_g = sig[:, 3 * H:4 * H]
        c_new = f_g * c + i_g * g_g
        h_new = o_g * jnp.tanh(c_new)
        # packed-sequence masks computed in-loop: tiny (2B,1) compares, off the MXU/EUP chain
        t_vec = jnp.where(is_fwd, step, T - 1 - step)
        valid = t_vec < lens                        # state frozen once t >= len
        last = t_vec == lens - 1                    # capture output[b, len-1, :]
        h = jnp.where(valid, h_new, h)
        c = jnp.where(valid, c_new, c)
        h_last = jnp.where(last, h_new, h_last)

    # ---- classifier on concat(h_fwd[len-1], h_bwd[len-1]); full (2B,128) tile store ----
    la = jnp.dot(h_last, wcls_ref[0:H, :], preferred_element_type=jnp.float32)      # (2B,128)
    lb = jnp.dot(h_last, wcls_ref[H:2 * H, :], preferred_element_type=jnp.float32)  # (2B,128)
    # roll the backward-rows result up by B so rows [0,B) = full logits; rows [B,2B) are junk
    logits_ref[...] = la + pltpu.roll(lb, shift=B, axis=0) + bcls_ref[...]


def bilstm_forward(params, word_ids, lengths):
    """word_ids: (B, T) int32, lengths: (B,) int32 -> logits (B, NUM_CLASSES)."""
    B, T = word_ids.shape
    H = HIDDEN
    CP = 128   # lane-dense classifier width (sliced back to NUM_CLASSES below)

    # --- BertEmbeddings gathers (glue, plain JAX) ---
    word_e = params["word_emb"][word_ids]                      # (B, T, H)
    pos_e = params["pos_emb"][jnp.arange(T)][None, :, :]       # (1, T, H)
    type_e = params["type_emb"][0][None, None, :]              # token_type_ids == 0
    emb_sum = (word_e + pos_e + type_e).astype(jnp.float32)    # (B, T, H)

    # Row layout consumed by the kernel: for step s, rows [s*2B, s*2B+B) carry the
    # forward direction's timestep s and the next B rows the backward direction's
    # timestep T-1-s, so each per-step access is one aligned 8-row slab.
    emb_tm = jnp.transpose(emb_sum, (1, 0, 2))                       # (T, B, H)
    emb_bidir = jnp.concatenate([emb_tm, emb_tm[::-1]], axis=1)      # (T, 2B, H)
    emb_rows = emb_bidir.reshape(T * 2 * B, H)                       # (T*2B, H)

    lens2 = jnp.concatenate([lengths, lengths]).reshape(2 * B, 1).astype(jnp.int32)
    # per-row direction flag (1 = forward, 0 = backward), repeating every 2B rows
    dir_row = jnp.concatenate([jnp.ones((B,), jnp.int32), jnp.zeros((B,), jnp.int32)])
    dir_all = jnp.tile(dir_row, (T,)).reshape(T * 2 * B, 1)

    # fused weights: per-direction gate order (i,f,g,o); biases folded (b_ih + b_hh)
    wih_cat = jnp.concatenate([params["wih_f"], params["wih_b"]], axis=1)   # (H, 8H)
    bih_cat = jnp.concatenate([params["b_f"], params["b_b"]], axis=1)       # (1, 8H)
    whh_cat = jnp.concatenate([params["whh_f"], params["whh_b"]], axis=1)   # (H, 8H)

    # tanh -> sigmoid fold: pre-scale the g-gate columns of both directions by 2
    g_scale = jnp.ones((8 * H,), jnp.float32)
    g_scale = g_scale.at[2 * H:3 * H].set(2.0).at[6 * H:7 * H].set(2.0)
    wih_cat = wih_cat * g_scale[None, :]
    whh_cat = whh_cat * g_scale[None, :]
    bih_cat = bih_cat * g_scale[None, :]

    # classifier padded to 128 output lanes for an unmasked (lane-dense) store
    wcls_pad = jnp.zeros((2 * H, CP), jnp.float32).at[:, :NUM_CLASSES].set(params["w_cls"])
    bcls_pad = jnp.zeros((1, CP), jnp.float32).at[:, :NUM_CLASSES].set(params["b_cls"])

    # NOTE(v7x scaling path): at larger batch, add a leading batch grid axis marked
    # "parallel" so both TensorCores run; at B=4 a single gridless call is fastest.
    vmem = pl.BlockSpec(memory_space=pltpu.MemorySpace.VMEM)
    logits_pad = pl.pallas_call(
        bilstm_kernel,
        out_shape=jax.ShapeDtypeStruct((2 * B, CP), jnp.float32),
        in_specs=[vmem] * 10,
        out_specs=vmem,
    )(dir_all, lens2, emb_rows, params["ln_gamma"], params["ln_beta"],
      wih_cat, bih_cat, whh_cat, wcls_pad, bcls_pad)
    return logits_pad[:B, :NUM_CLASSES]


def bilstm_reference(params, word_ids, lengths):
    """Plain-JAX port of the PyTorch module (packed BiLSTM), for correctness checking."""
    B, T = word_ids.shape
    H = HIDDEN
    word_e = params["word_emb"][word_ids]
    pos_e = params["pos_emb"][jnp.arange(T)][None, :, :]
    type_e = params["type_emb"][0][None, None, :]
    x = (word_e + pos_e + type_e).astype(jnp.float32)
    u = jnp.mean(x, axis=-1, keepdims=True)
    s = jnp.mean((x - u) ** 2, axis=-1, keepdims=True)
    xln = params["ln_gamma"] * ((x - u) / jnp.sqrt(s + LN_EPS)) + params["ln_beta"]

    def cell(x_t, h, c, wih, whh, b):
        gates = x_t @ wih + h @ whh + b
        i = jax.nn.sigmoid(gates[:, 0 * H:1 * H])
        f = jax.nn.sigmoid(gates[:, 1 * H:2 * H])
        g = jnp.tanh(gates[:, 2 * H:3 * H])
        o = jax.nn.sigmoid(gates[:, 3 * H:4 * H])
        c_new = f * c + i * g
        return o * jnp.tanh(c_new), c_new

    lens = lengths.reshape(B, 1)
    zeros = jnp.zeros((B, H), jnp.float32)

    h, c, h_f_last = zeros, zeros, zeros
    for t in range(T):
        h_new, c_new = cell(xln[:, t, :], h, c,
                            params["wih_f"], params["whh_f"], params["b_f"])
        valid = t < lens
        h = jnp.where(valid, h_new, h)
        c = jnp.where(valid, c_new, c)
        h_f_last = jnp.where(t == lens - 1, h_new, h_f_last)

    h, c, h_b_last = zeros, zeros, zeros
    for t in range(T - 1, -1, -1):
        h_new, c_new = cell(xln[:, t, :], h, c,
                            params["wih_b"], params["whh_b"], params["b_b"])
        valid = t < lens
        h = jnp.where(valid, h_new, h)
        c = jnp.where(valid, c_new, c)
        h_b_last = jnp.where(t == lens - 1, h_new, h_b_last)

    feat = jnp.concatenate([h_f_last, h_b_last], axis=-1)
    return feat @ params["w_cls"] + params["b_cls"]


def init_params(key):
    ks = jax.random.split(key, 14)

    def unif(k, shape, scale):
        return jax.random.uniform(k, shape, jnp.float32, -scale, scale)

    word_emb = jax.random.normal(ks[0], (VOCAB, HIDDEN), jnp.float32) * 0.02
    word_emb = word_emb.at[0].set(0.0)                         # padding_idx = 0
    pos_emb = jax.random.normal(ks[1], (MAX_POS, HIDDEN), jnp.float32) * 0.02
    type_emb = jax.random.normal(ks[2], (TYPE_VOCAB, HIDDEN), jnp.float32) * 0.02

    s = 1.0 / (HIDDEN ** 0.5)
    s_cls = 1.0 / ((2 * HIDDEN) ** 0.5)
    return {
        "word_emb": word_emb,
        "pos_emb": pos_emb,
        "type_emb": type_emb,
        "ln_gamma": jnp.ones((1, HIDDEN), jnp.float32),
        "ln_beta": jnp.zeros((1, HIDDEN), jnp.float32),
        # LSTM weights stored transposed for x @ W layout: (in, 4H), gate order i,f,g,o
        "wih_f": unif(ks[3], (EMB, 4 * HIDDEN), s),
        "whh_f": unif(ks[4], (HIDDEN, 4 * HIDDEN), s),
        "b_f": unif(ks[5], (1, 4 * HIDDEN), s) + unif(ks[6], (1, 4 * HIDDEN), s),
        "wih_b": unif(ks[7], (EMB, 4 * HIDDEN), s),
        "whh_b": unif(ks[8], (HIDDEN, 4 * HIDDEN), s),
        "b_b": unif(ks[9], (1, 4 * HIDDEN), s) + unif(ks[10], (1, 4 * HIDDEN), s),
        "w_cls": unif(ks[11], (2 * HIDDEN, NUM_CLASSES), s_cls),
        "b_cls": unif(ks[12], (1, NUM_CLASSES), s_cls),
    }


if __name__ == "__main__":
    root = jax.random.PRNGKey(0)
    pkey, dkey = jax.random.split(root, 2)

    params = init_params(pkey)

    lengths = jnp.array([8, 5, 3, 6], dtype=jnp.int32)          # (B,)
    word_ids = jax.random.randint(dkey, (BATCH, SEQ), 1, VOCAB, dtype=jnp.int32)
    valid_mask = jnp.arange(SEQ)[None, :] < lengths[:, None]
    word_ids = jnp.where(valid_mask, word_ids, 0)               # pad with padding_idx 0

    logits = bilstm_forward(params, word_ids, lengths)
    jax.block_until_ready(logits)
    assert logits.shape == (BATCH, NUM_CLASSES)
    assert bool(jnp.all(jnp.isfinite(logits)))

    ref = bilstm_reference(params, word_ids, lengths)
    max_diff = float(jnp.max(jnp.abs(logits - ref)))
    assert bool(jnp.allclose(logits, ref, atol=5e-3, rtol=5e-3)), f"max |diff|={max_diff}"
    print("KERNEL_OK")
</pallas_src>

<mosaic_0001>
module attributes {stable_mosaic.version = 11 : i64} {
  func.func @bilstm_kernel(%arg0: memref<64x1xi32, #tpu.memory_space<vmem>>, %arg1: memref<8x1xi32, #tpu.memory_space<vmem>>, %arg2: memref<64x32xf32, #tpu.memory_space<vmem>>, %arg3: memref<1x32xf32, #tpu.memory_space<vmem>>, %arg4: memref<1x32xf32, #tpu.memory_space<vmem>>, %arg5: memref<32x256xf32, #tpu.memory_space<vmem>>, %arg6: memref<1x256xf32, #tpu.memory_space<vmem>>, %arg7: memref<32x256xf32, #tpu.memory_space<vmem>>, %arg8: memref<64x128xf32, #tpu.memory_space<vmem>>, %arg9: memref<1x128xf32, #tpu.memory_space<vmem>>, %arg10: memref<8x128xf32, #tpu.memory_space<vmem>>) attributes {dimension_semantics = [], scalar_prefetch = 0 : i64, scratch_operands = 0 : i64, tpu.core_type = #tpu.core_type<tc>} {
    %c0 = arith.constant 0 : index
    %c0_0 = arith.constant 0 : index
    %0 = vector.load %arg2[%c0, %c0_0] : memref<64x32xf32, #tpu.memory_space<vmem>>, vector<64x32xf32>
    %cst = arith.constant dense<0.000000e+00> : vector<64xf32>
    %1 = vector.multi_reduction <add>, %0, %cst [1] : vector<64x32xf32> to vector<64xf32>
    %2 = vector.shape_cast %1 : vector<64xf32> to vector<64x1xf32>
    %cst_1 = arith.constant 3.200000e+01 : f32
    %3 = vector.broadcast %cst_1 : f32 to vector<64x1xf32>
    %4 = arith.divf %2, %3 : vector<64x1xf32>
    %5 = vector.broadcast %4 : vector<64x1xf32> to vector<64x32xf32>
    %6 = arith.subf %0, %5 : vector<64x32xf32>
    %7 = vector.broadcast %4 : vector<64x1xf32> to vector<64x32xf32>
    %8 = arith.subf %0, %7 : vector<64x32xf32>
    %9 = arith.mulf %6, %8 : vector<64x32xf32>
    %cst_2 = arith.constant dense<0.000000e+00> : vector<64xf32>
    %10 = vector.multi_reduction <add>, %9, %cst_2 [1] : vector<64x32xf32> to vector<64xf32>
    %11 = vector.shape_cast %10 : vector<64xf32> to vector<64x1xf32>
    %cst_3 = arith.constant 3.200000e+01 : f32
    %12 = vector.broadcast %cst_3 : f32 to vector<64x1xf32>
    %13 = arith.divf %11, %12 : vector<64x1xf32>
    %c0_4 = arith.constant 0 : index
    %c0_5 = arith.constant 0 : index
    %14 = vector.load %arg3[%c0_4, %c0_5] : memref<1x32xf32, #tpu.memory_space<vmem>>, vector<1x32xf32>
    %15 = vector.broadcast %4 : vector<64x1xf32> to vector<64x32xf32>
    %16 = arith.subf %0, %15 : vector<64x32xf32>
    %cst_6 = arith.constant 9.99999996E-13 : f32
    %17 = vector.broadcast %cst_6 : f32 to vector<64x1xf32>
    %18 = arith.addf %13, %17 : vector<64x1xf32>
    %19 = math.rsqrt %18 : vector<64x1xf32>
    %20 = vector.broadcast %19 : vector<64x1xf32> to vector<64x32xf32>
    %21 = arith.mulf %16, %20 : vector<64x32xf32>
    %22 = vector.broadcast %14 : vector<1x32xf32> to vector<64x32xf32>
    %23 = arith.mulf %22, %21 : vector<64x32xf32>
    %c0_7 = arith.constant 0 : index
    %c0_8 = arith.constant 0 : index
    %24 = vector.load %arg4[%c0_7, %c0_8] : memref<1x32xf32, #tpu.memory_space<vmem>>, vector<1x32xf32>
    %25 = vector.broadcast %24 : vector<1x32xf32> to vector<64x32xf32>
    %26 = arith.addf %23, %25 : vector<64x32xf32>
    %c0_9 = arith.constant 0 : index
    %c0_10 = arith.constant 0 : index
    %27 = vector.load %arg5[%c0_9, %c0_10] : memref<32x256xf32, #tpu.memory_space<vmem>>, vector<32x256xf32>
    %cst_11 = arith.constant dense<0.000000e+00> : vector<64x256xf32>
    %28 = tpu.matmul %26, %27, %cst_11 {dimension_numbers = #tpu.dot_dimension_numbers<[1], [0], [0], [1], [0, 0, 1, 1], [], []>} : vector<64x32xf32>, vector<32x256xf32>, vector<64x256xf32> -> vector<64x256xf32>
    %c0_12 = arith.constant 0 : index
    %c0_13 = arith.constant 0 : index
    %29 = vector.load %arg6[%c0_12, %c0_13] : memref<1x256xf32, #tpu.memory_space<vmem>>, vector<1x256xf32>
    %30 = vector.broadcast %29 : vector<1x256xf32> to vector<64x256xf32>
    %31 = arith.addf %28, %30 : vector<64x256xf32>
    %c0_14 = arith.constant 0 : index
    %c0_15 = arith.constant 0 : index
    %32 = vector.load %arg0[%c0_14, %c0_15] : memref<64x1xi32, #tpu.memory_space<vmem>>, vector<64x1xi32>
    %c0_i32 = arith.constant 0 : i32
    %33 = vector.broadcast %c0_i32 : i32 to vector<64x1xi32>
    %34 = arith.cmpi sgt, %32, %33 : vector<64x1xi32>
    %35 = vector.extract_strided_slice %31 {offsets = [0, 0], sizes = [64, 128], strides = [1, 1]} : vector<64x256xf32> to vector<64x128xf32>
    %36 = vector.extract_strided_slice %31 {offsets = [0, 128], sizes = [64, 128], strides = [1, 1]} : vector<64x256xf32> to vector<64x128xf32>
    %37 = vector.shape_cast %34 : vector<64x1xi1> to vector<64x1xi1>
    %38 = vector.broadcast %37 : vector<64x1xi1> to vector<64x128xi1>
    %39 = arith.select %38, %35, %36 : vector<64x128xi1>, vector<64x128xf32>
    %c0_16 = arith.constant 0 : index
    %c0_17 = arith.constant 0 : index
    %40 = vector.load %arg1[%c0_16, %c0_17] : memref<8x1xi32, #tpu.memory_space<vmem>>, vector<8x1xi32>
    %c0_18 = arith.constant 0 : index
    %c0_19 = arith.constant 0 : index
    %41 = vector.load %arg0[%c0_18, %c0_19] : memref<64x1xi32, #tpu.memory_space<vmem>>, vector<8x1xi32>
    %c0_i32_20 = arith.constant 0 : i32
    %42 = vector.broadcast %c0_i32_20 : i32 to vector<8x1xi32>
    %43 = arith.cmpi sgt, %41, %42 : vector<8x1xi32>
    %c0_21 = arith.constant 0 : index
    %c0_22 = arith.constant 0 : index
    %44 = vector.load %arg7[%c0_21, %c0_22] : memref<32x256xf32, #tpu.memory_space<vmem>>, vector<32x256xf32>
    %cst_23 = arith.constant 0.000000e+00 : f32
    %45 = vector.broadcast %cst_23 : f32 to vector<8x32xf32>
    %cst_24 = arith.constant 0.000000e+00 : f32
    %46 = vector.broadcast %cst_24 : f32 to vector<8x32xf32>
    %cst_25 = arith.constant 0.000000e+00 : f32
    %47 = vector.broadcast %cst_25 : f32 to vector<8x32xf32>
    %cst_26 = arith.constant dense<0.000000e+00> : vector<8x256xf32>
    %48 = tpu.matmul %45, %44, %cst_26 {dimension_numbers = #tpu.dot_dimension_numbers<[1], [0], [0], [1], [0, 0, 1, 1], [], []>} : vector<8x32xf32>, vector<32x256xf32>, vector<8x256xf32> -> vector<8x256xf32>
    %49 = vector.extract_strided_slice %48 {offsets = [0, 0], sizes = [8, 128], strides = [1, 1]} : vector<8x256xf32> to vector<8x128xf32>
    %50 = vector.extract_strided_slice %48 {offsets = [0, 128], sizes = [8, 128], strides = [1, 1]} : vector<8x256xf32> to vector<8x128xf32>
    %51 = vector.shape_cast %43 : vector<8x1xi1> to vector<8x1xi1>
    %52 = vector.broadcast %51 : vector<8x1xi1> to vector<8x128xi1>
    %53 = arith.select %52, %49, %50 : vector<8x128xi1>, vector<8x128xf32>
    %54 = vector.extract_strided_slice %39 {offsets = [0, 0], sizes = [8, 128], strides = [1, 1]} : vector<64x128xf32> to vector<8x128xf32>
    %55 = arith.addf %53, %54 : vector<8x128xf32>
    %56 = arith.negf %55 : vector<8x128xf32>
    %57 = math.exp %56 : vector<8x128xf32>
    %cst_27 = arith.constant 1.000000e+00 : f32
    %58 = vector.broadcast %cst_27 : f32 to vector<8x128xf32>
    %59 = arith.addf %58, %57 : vector<8x128xf32>
    %60 = arith.divf %58, %59 : vector<8x128xf32>
    %61 = vector.extract_strided_slice %60 {offsets = [0, 0], sizes = [8, 32], strides = [1, 1]} : vector<8x128xf32> to vector<8x32xf32>
    %62 = vector.extract_strided_slice %60 {offsets = [0, 32], sizes = [8, 32], strides = [1, 1]} : vector<8x128xf32> to vector<8x32xf32>
    %63 = vector.extract_strided_slice %60 {offsets = [0, 64], sizes = [8, 32], strides = [1, 1]} : vector<8x128xf32> to vector<8x32xf32>
    %cst_28 = arith.constant 2.000000e+00 : f32
    %64 = vector.broadcast %cst_28 : f32 to vector<8x32xf32>
    %65 = arith.mulf %64, %63 : vector<8x32xf32>
    %cst_29 = arith.constant 1.000000e+00 : f32
    %66 = vector.broadcast %cst_29 : f32 to vector<8x32xf32>
    %67 = arith.subf %65, %66 : vector<8x32xf32>
    %68 = vector.extract_strided_slice %60 {offsets = [0, 96], sizes = [8, 32], strides = [1, 1]} : vector<8x128xf32> to vector<8x32xf32>
    %69 = arith.mulf %62, %46 : vector<8x32xf32>
    %70 = arith.mulf %61, %67 : vector<8x32xf32>
    %71 = arith.addf %69, %70 : vector<8x32xf32>
    %72 = math.tanh %71 : vector<8x32xf32>
    %73 = arith.mulf %68, %72 : vector<8x32xf32>
    %c0_i32_30 = arith.constant 0 : i32
    %c7_i32 = arith.constant 7 : i32
    %74 = vector.broadcast %c0_i32_30 : i32 to vector<8x1xi32>
    %75 = vector.broadcast %c7_i32 : i32 to vector<8x1xi32>
    %76 = arith.select %43, %74, %75 : vector<8x1xi1>, vector<8x1xi32>
    %77 = arith.cmpi slt, %76, %40 : vector<8x1xi32>
    %c1_i32 = arith.constant 1 : i32
    %78 = vector.broadcast %c1_i32 : i32 to vector<8x1xi32>
    %79 = arith.subi %40, %78 : vector<8x1xi32>
    %80 = arith.cmpi eq, %76, %79 : vector<8x1xi32>
    %81 = vector.shape_cast %77 : vector<8x1xi1> to vector<8x1xi1>
    %82 = vector.broadcast %81 : vector<8x1xi1> to vector<8x32xi1>
    %83 = arith.select %82, %73, %45 : vector<8x32xi1>, vector<8x32xf32>
    %84 = vector.shape_cast %77 : vector<8x1xi1> to vector<8x1xi1>
    %85 = vector.broadcast %84 : vector<8x1xi1> to vector<8x32xi1>
    %86 = arith.select %85, %71, %46 : vector<8x32xi1>, vector<8x32xf32>
    %87 = vector.shape_cast %80 : vector<8x1xi1> to vector<8x1xi1>
    %88 = vector.broadcast %87 : vector<8x1xi1> to vector<8x32xi1>
    %89 = arith.select %88, %73, %47 : vector<8x32xi1>, vector<8x32xf32>
    %cst_31 = arith.constant dense<0.000000e+00> : vector<8x256xf32>
    %90 = tpu.matmul %83, %44, %cst_31 {dimension_numbers = #tpu.dot_dimension_numbers<[1], [0], [0], [1], [0, 0, 1, 1], [], []>} : vector<8x32xf32>, vector<32x256xf32>, vector<8x256xf32> -> vector<8x256xf32>
    %91 = vector.extract_strided_slice %90 {offsets = [0, 0], sizes = [8, 128], strides = [1, 1]} : vector<8x256xf32> to vector<8x128xf32>
    %92 = vector.extract_strided_slice %90 {offsets = [0, 128], sizes = [8, 128], strides = [1, 1]} : vector<8x256xf32> to vector<8x128xf32>
    %93 = vector.shape_cast %43 : vector<8x1xi1> to vector<8x1xi1>
    %94 = vector.broadcast %93 : vector<8x1xi1> to vector<8x128xi1>
    %95 = arith.select %94, %91, %92 : vector<8x128xi1>, vector<8x128xf32>
    %96 = vector.extract_strided_slice %39 {offsets = [8, 0], sizes = [8, 128], strides = [1, 1]} : vector<64x128xf32> to vector<8x128xf32>
    %97 = arith.addf %95, %96 : vector<8x128xf32>
    %98 = arith.negf %97 : vector<8x128xf32>
    %99 = math.exp %98 : vector<8x128xf32>
    %cst_32 = arith.constant 1.000000e+00 : f32
    %100 = vector.broadcast %cst_32 : f32 to vector<8x128xf32>
    %101 = arith.addf %100, %99 : vector<8x128xf32>
    %102 = arith.divf %100, %101 : vector<8x128xf32>
    %103 = vector.extract_strided_slice %102 {offsets = [0, 0], sizes = [8, 32], strides = [1, 1]} : vector<8x128xf32> to vector<8x32xf32>
    %104 = vector.extract_strided_slice %102 {offsets = [0, 32], sizes = [8, 32], strides = [1, 1]} : vector<8x128xf32> to vector<8x32xf32>
    %105 = vector.extract_strided_slice %102 {offsets = [0, 64], sizes = [8, 32], strides = [1, 1]} : vector<8x128xf32> to vector<8x32xf32>
    %cst_33 = arith.constant 2.000000e+00 : f32
    %106 = vector.broadcast %cst_33 : f32 to vector<8x32xf32>
    %107 = arith.mulf %106, %105 : vector<8x32xf32>
    %cst_34 = arith.constant 1.000000e+00 : f32
    %108 = vector.broadcast %cst_34 : f32 to vector<8x32xf32>
    %109 = arith.subf %107, %108 : vector<8x32xf32>
    %110 = vector.extract_strided_slice %102 {offsets = [0, 96], sizes = [8, 32], strides = [1, 1]} : vector<8x128xf32> to vector<8x32xf32>
    %111 = arith.mulf %104, %86 : vector<8x32xf32>
    %112 = arith.mulf %103, %109 : vector<8x32xf32>
    %113 = arith.addf %111, %112 : vector<8x32xf32>
    %114 = math.tanh %113 : vector<8x32xf32>
    %115 = arith.mulf %110, %114 : vector<8x32xf32>
    %c1_i32_35 = arith.constant 1 : i32
    %c6_i32 = arith.constant 6 : i32
    %116 = vector.broadcast %c1_i32_35 : i32 to vector<8x1xi32>
    %117 = vector.broadcast %c6_i32 : i32 to vector<8x1xi32>
    %118 = arith.select %43, %116, %117 : vector<8x1xi1>, vector<8x1xi32>
    %119 = arith.cmpi slt, %118, %40 : vector<8x1xi32>
    %c1_i32_36 = arith.constant 1 : i32
    %120 = vector.broadcast %c1_i32_36 : i32 to vector<8x1xi32>
    %121 = arith.subi %40, %120 : vector<8x1xi32>
    %122 = arith.cmpi eq, %118, %121 : vector<8x1xi32>
    %123 = vector.shape_cast %119 : vector<8x1xi1> to vector<8x1xi1>
    %124 = vector.broadcast %123 : vector<8x1xi1> to vector<8x32xi1>
    %125 = arith.select %124, %115, %83 : vector<8x32xi1>, vector<8x32xf32>
    %126 = vector.shape_cast %119 : vector<8x1xi1> to vector<8x1xi1>
    %127 = vector.broadcast %126 : vector<8x1xi1> to vector<8x32xi1>
    %128 = arith.select %127, %113, %86 : vector<8x32xi1>, vector<8x32xf32>
    %129 = vector.shape_cast %122 : vector<8x1xi1> to vector<8x1xi1>
    %130 = vector.broadcast %129 : vector<8x1xi1> to vector<8x32xi1>
    %131 = arith.select %130, %115, %89 : vector<8x32xi1>, vector<8x32xf32>
    %cst_37 = arith.constant dense<0.000000e+00> : vector<8x256xf32>
    %132 = tpu.matmul %125, %44, %cst_37 {dimension_numbers = #tpu.dot_dimension_numbers<[1], [0], [0], [1], [0, 0, 1, 1], [], []>} : vector<8x32xf32>, vector<32x256xf32>, vector<8x256xf32> -> vector<8x256xf32>
    %133 = vector.extract_strided_slice %132 {offsets = [0, 0], sizes = [8, 128], strides = [1, 1]} : vector<8x256xf32> to vector<8x128xf32>
    %134 = vector.extract_strided_slice %132 {offsets = [0, 128], sizes = [8, 128], strides = [1, 1]} : vector<8x256xf32> to vector<8x128xf32>
    %135 = vector.shape_cast %43 : vector<8x1xi1> to vector<8x1xi1>
    %136 = vector.broadcast %135 : vector<8x1xi1> to vector<8x128xi1>
    %137 = arith.select %136, %133, %134 : vector<8x128xi1>, vector<8x128xf32>
    %138 = vector.extract_strided_slice %39 {offsets = [16, 0], sizes = [8, 128], strides = [1, 1]} : vector<64x128xf32> to vector<8x128xf32>
    %139 = arith.addf %137, %138 : vector<8x128xf32>
    %140 = arith.negf %139 : vector<8x128xf32>
    %141 = math.exp %140 : vector<8x128xf32>
    %cst_38 = arith.constant 1.000000e+00 : f32
    %142 = vector.broadcast %cst_38 : f32 to vector<8x128xf32>
    %143 = arith.addf %142, %141 : vector<8x128xf32>
    %144 = arith.divf %142, %143 : vector<8x128xf32>
    %145 = vector.extract_strided_slice %144 {offsets = [0, 0], sizes = [8, 32], strides = [1, 1]} : vector<8x128xf32> to vector<8x32xf32>
    %146 = vector.extract_strided_slice %144 {offsets = [0, 32], sizes = [8, 32], strides = [1, 1]} : vector<8x128xf32> to vector<8x32xf32>
    %147 = vector.extract_strided_slice %144 {offsets = [0, 64], sizes = [8, 32], strides = [1, 1]} : vector<8x128xf32> to vector<8x32xf32>
    %cst_39 = arith.constant 2.000000e+00 : f32
    %148 = vector.broadcast %cst_39 : f32 to vector<8x32xf32>
    %149 = arith.mulf %148, %147 : vector<8x32xf32>
    %cst_40 = arith.constant 1.000000e+00 : f32
    %150 = vector.broadcast %cst_40 : f32 to vector<8x32xf32>
    %151 = arith.subf %149, %150 : vector<8x32xf32>
    %152 = vector.extract_strided_slice %144 {offsets = [0, 96], sizes = [8, 32], strides = [1, 1]} : vector<8x128xf32> to vector<8x32xf32>
    %153 = arith.mulf %146, %128 : vector<8x32xf32>
    %154 = arith.mulf %145, %151 : vector<8x32xf32>
    %155 = arith.addf %153, %154 : vector<8x32xf32>
    %156 = math.tanh %155 : vector<8x32xf32>
    %157 = arith.mulf %152, %156 : vector<8x32xf32>
    %c2_i32 = arith.constant 2 : i32
    %c5_i32 = arith.constant 5 : i32
    %158 = vector.broadcast %c2_i32 : i32 to vector<8x1xi32>
    %159 = vector.broadcast %c5_i32 : i32 to vector<8x1xi32>
    %160 = arith.select %43, %158, %159 : vector<8x1xi1>, vector<8x1xi32>
    %161 = arith.cmpi slt, %160, %40 : vector<8x1xi32>
    %c1_i32_41 = arith.constant 1 : i32
    %162 = vector.broadcast %c1_i32_41 : i32 to vector<8x1xi32>
    %163 = arith.subi %40, %162 : vector<8x1xi32>
    %164 = arith.cmpi eq, %160, %163 : vector<8x1xi32>
    %165 = vector.shape_cast %161 : vector<8x1xi1> to vector<8x1xi1>
    %166 = vector.broadcast %165 : vector<8x1xi1> to vector<8x32xi1>
    %167 = arith.select %166, %157, %125 : vector<8x32xi1>, vector<8x32xf32>
    %168 = vector.shape_cast %161 : vector<8x1xi1> to vector<8x1xi1>
    %169 = vector.broadcast %168 : vector<8x1xi1> to vector<8x32xi1>
    %170 = arith.select %169, %155, %128 : vector<8x32xi1>, vector<8x32xf32>
    %171 = vector.shape_cast %164 : vector<8x1xi1> to vector<8x1xi1>
    %172 = vector.broadcast %171 : vector<8x1xi1> to vector<8x32xi1>
    %173 = arith.select %172, %157, %131 : vector<8x32xi1>, vector<8x32xf32>
    %cst_42 = arith.constant dense<0.000000e+00> : vector<8x256xf32>
    %174 = tpu.matmul %167, %44, %cst_42 {dimension_numbers = #tpu.dot_dimension_numbers<[1], [0], [0], [1], [0, 0, 1, 1], [], []>} : vector<8x32xf32>, vector<32x256xf32>, vector<8x256xf32> -> vector<8x256xf32>
    %175 = vector.extract_strided_slice %174 {offsets = [0, 0], sizes = [8, 128], strides = [1, 1]} : vector<8x256xf32> to vector<8x128xf32>
    %176 = vector.extract_strided_slice %174 {offsets = [0, 128], sizes = [8, 128], strides = [1, 1]} : vector<8x256xf32> to vector<8x128xf32>
    %177 = vector.shape_cast %43 : vector<8x1xi1> to vector<8x1xi1>
    %178 = vector.broadcast %177 : vector<8x1xi1> to vector<8x128xi1>
    %179 = arith.select %178, %175, %176 : vector<8x128xi1>, vector<8x128xf32>
    %180 = vector.extract_strided_slice %39 {offsets = [24, 0], sizes = [8, 128], strides = [1, 1]} : vector<64x128xf32> to vector<8x128xf32>
    %181 = arith.addf %179, %180 : vector<8x128xf32>
    %182 = arith.negf %181 : vector<8x128xf32>
    %183 = math.exp %182 : vector<8x128xf32>
    %cst_43 = arith.constant 1.000000e+00 : f32
    %184 = vector.broadcast %cst_43 : f32 to vector<8x128xf32>
    %185 = arith.addf %184, %183 : vector<8x128xf32>
    %186 = arith.divf %184, %185 : vector<8x128xf32>
    %187 = vector.extract_strided_slice %186 {offsets = [0, 0], sizes = [8, 32], strides = [1, 1]} : vector<8x128xf32> to vector<8x32xf32>
    %188 = vector.extract_strided_slice %186 {offsets = [0, 32], sizes = [8, 32], strides = [1, 1]} : vector<8x128xf32> to vector<8x32xf32>
    %189 = vector.extract_strided_slice %186 {offsets = [0, 64], sizes = [8, 32], strides = [1, 1]} : vector<8x128xf32> to vector<8x32xf32>
    %cst_44 = arith.constant 2.000000e+00 : f32
    %190 = vector.broadcast %cst_44 : f32 to vector<8x32xf32>
    %191 = arith.mulf %190, %189 : vector<8x32xf32>
    %cst_45 = arith.constant 1.000000e+00 : f32
    %192 = vector.broadcast %cst_45 : f32 to vector<8x32xf32>
    %193 = arith.subf %191, %192 : vector<8x32xf32>
    %194 = vector.extract_strided_slice %186 {offsets = [0, 96], sizes = [8, 32], strides = [1, 1]} : vector<8x128xf32> to vector<8x32xf32>
    %195 = arith.mulf %188, %170 : vector<8x32xf32>
    %196 = arith.mulf %187, %193 : vector<8x32xf32>
    %197 = arith.addf %195, %196 : vector<8x32xf32>
    %198 = math.tanh %197 : vector<8x32xf32>
    %199 = arith.mulf %194, %198 : vector<8x32xf32>
    %c3_i32 = arith.constant 3 : i32
    %c4_i32 = arith.constant 4 : i32
    %200 = vector.broadcast %c3_i32 : i32 to vector<8x1xi32>
    %201 = vector.broadcast %c4_i32 : i32 to vector<8x1xi32>
    %202 = arith.select %43, %200, %201 : vector<8x1xi1>, vector<8x1xi32>
    %203 = arith.cmpi slt, %202, %40 : vector<8x1xi32>
    %c1_i32_46 = arith.constant 1 : i32
    %204 = vector.broadcast %c1_i32_46 : i32 to vector<8x1xi32>
    %205 = arith.subi %40, %204 : vector<8x1xi32>
    %206 = arith.cmpi eq, %202, %205 : vector<8x1xi32>
    %207 = vector.shape_cast %203 : vector<8x1xi1> to vector<8x1xi1>
    %208 = vector.broadcast %207 : vector<8x1xi1> to vector<8x32xi1>
    %209 = arith.select %208, %199, %167 : vector<8x32xi1>, vector<8x32xf32>
    %210 = vector.shape_cast %203 : vector<8x1xi1> to vector<8x1xi1>
    %211 = vector.broadcast %210 : vector<8x1xi1> to vector<8x32xi1>
    %212 = arith.select %211, %197, %170 : vector<8x32xi1>, vector<8x32xf32>
    %213 = vector.shape_cast %206 : vector<8x1xi1> to vector<8x1xi1>
    %214 = vector.broadcast %213 : vector<8x1xi1> to vector<8x32xi1>
    %215 = arith.select %214, %199, %173 : vector<8x32xi1>, vector<8x32xf32>
    %cst_47 = arith.constant dense<0.000000e+00> : vector<8x256xf32>
    %216 = tpu.matmul %209, %44, %cst_47 {dimension_numbers = #tpu.dot_dimension_numbers<[1], [0], [0], [1], [0, 0, 1, 1], [], []>} : vector<8x32xf32>, vector<32x256xf32>, vector<8x256xf32> -> vector<8x256xf32>
    %217 = vector.extract_strided_slice %216 {offsets = [0, 0], sizes = [8, 128], strides = [1, 1]} : vector<8x256xf32> to vector<8x128xf32>
    %218 = vector.extract_strided_slice %216 {offsets = [0, 128], sizes = [8, 128], strides = [1, 1]} : vector<8x256xf32> to vector<8x128xf32>
    %219 = vector.shape_cast %43 : vector<8x1xi1> to vector<8x1xi1>
    %220 = vector.broadcast %219 : vector<8x1xi1> to vector<8x128xi1>
    %221 = arith.select %220, %217, %218 : vector<8x128xi1>, vector<8x128xf32>
    %222 = vector.extract_strided_slice %39 {offsets = [32, 0], sizes = [8, 128], strides = [1, 1]} : vector<64x128xf32> to vector<8x128xf32>
    %223 = arith.addf %221, %222 : vector<8x128xf32>
    %224 = arith.negf %223 : vector<8x128xf32>
    %225 = math.exp %224 : vector<8x128xf32>
    %cst_48 = arith.constant 1.000000e+00 : f32
    %226 = vector.broadcast %cst_48 : f32 to vector<8x128xf32>
    %227 = arith.addf %226, %225 : vector<8x128xf32>
    %228 = arith.divf %226, %227 : vector<8x128xf32>
    %229 = vector.extract_strided_slice %228 {offsets = [0, 0], sizes = [8, 32], strides = [1, 1]} : vector<8x128xf32> to vector<8x32xf32>
    %230 = vector.extract_strided_slice %228 {offsets = [0, 32], sizes = [8, 32], strides = [1, 1]} : vector<8x128xf32> to vector<8x32xf32>
    %231 = vector.extract_strided_slice %228 {offsets = [0, 64], sizes = [8, 32], strides = [1, 1]} : vector<8x128xf32> to vector<8x32xf32>
    %cst_49 = arith.constant 2.000000e+00 : f32
    %232 = vector.broadcast %cst_49 : f32 to vector<8x32xf32>
    %233 = arith.mulf %232, %231 : vector<8x32xf32>
    %cst_50 = arith.constant 1.000000e+00 : f32
    %234 = vector.broadcast %cst_50 : f32 to vector<8x32xf32>
    %235 = arith.subf %233, %234 : vector<8x32xf32>
    %236 = vector.extract_strided_slice %228 {offsets = [0, 96], sizes = [8, 32], strides = [1, 1]} : vector<8x128xf32> to vector<8x32xf32>
    %237 = arith.mulf %230, %212 : vector<8x32xf32>
    %238 = arith.mulf %229, %235 : vector<8x32xf32>
    %239 = arith.addf %237, %238 : vector<8x32xf32>
    %240 = math.tanh %239 : vector<8x32xf32>
    %241 = arith.mulf %236, %240 : vector<8x32xf32>
    %c4_i32_51 = arith.constant 4 : i32
    %c3_i32_52 = arith.constant 3 : i32
    %242 = vector.broadcast %c4_i32_51 : i32 to vector<8x1xi32>
    %243 = vector.broadcast %c3_i32_52 : i32 to vector<8x1xi32>
    %244 = arith.select %43, %242, %243 : vector<8x1xi1>, vector<8x1xi32>
    %245 = arith.cmpi slt, %244, %40 : vector<8x1xi32>
    %c1_i32_53 = arith.constant 1 : i32
    %246 = vector.broadcast %c1_i32_53 : i32 to vector<8x1xi32>
    %247 = arith.subi %40, %246 : vector<8x1xi32>
    %248 = arith.cmpi eq, %244, %247 : vector<8x1xi32>
    %249 = vector.shape_cast %245 : vector<8x1xi1> to vector<8x1xi1>
    %250 = vector.broadcast %249 : vector<8x1xi1> to vector<8x32xi1>
    %251 = arith.select %250, %241, %209 : vector<8x32xi1>, vector<8x32xf32>
    %252 = vector.shape_cast %245 : vector<8x1xi1> to vector<8x1xi1>
    %253 = vector.broadcast %252 : vector<8x1xi1> to vector<8x32xi1>
    %254 = arith.select %253, %239, %212 : vector<8x32xi1>, vector<8x32xf32>
    %255 = vector.shape_cast %248 : vector<8x1xi1> to vector<8x1xi1>
    %256 = vector.broadcast %255 : vector<8x1xi1> to vector<8x32xi1>
    %257 = arith.select %256, %241, %215 : vector<8x32xi1>, vector<8x32xf32>
    %cst_54 = arith.constant dense<0.000000e+00> : vector<8x256xf32>
    %258 = tpu.matmul %251, %44, %cst_54 {dimension_numbers = #tpu.dot_dimension_numbers<[1], [0], [0], [1], [0, 0, 1, 1], [], []>} : vector<8x32xf32>, vector<32x256xf32>, vector<8x256xf32> -> vector<8x256xf32>
    %259 = vector.extract_strided_slice %258 {offsets = [0, 0], sizes = [8, 128], strides = [1, 1]} : vector<8x256xf32> to vector<8x128xf32>
    %260 = vector.extract_strided_slice %258 {offsets = [0, 128], sizes = [8, 128], strides = [1, 1]} : vector<8x256xf32> to vector<8x128xf32>
    %261 = vector.shape_cast %43 : vector<8x1xi1> to vector<8x1xi1>
    %262 = vector.broadcast %261 : vector<8x1xi1> to vector<8x128xi1>
    %263 = arith.select %262, %259, %260 : vector<8x128xi1>, vector<8x128xf32>
    %264 = vector.extract_strided_slice %39 {offsets = [40, 0], sizes = [8, 128], strides = [1, 1]} : vector<64x128xf32> to vector<8x128xf32>
    %265 = arith.addf %263, %264 : vector<8x128xf32>
    %266 = arith.negf %265 : vector<8x128xf32>
    %267 = math.exp %266 : vector<8x128xf32>
    %cst_55 = arith.constant 1.000000e+00 : f32
    %268 = vector.broadcast %cst_55 : f32 to vector<8x128xf32>
    %269 = arith.addf %268, %267 : vector<8x128xf32>
    %270 = arith.divf %268, %269 : vector<8x128xf32>
    %271 = vector.extract_strided_slice %270 {offsets = [0, 0], sizes = [8, 32], strides = [1, 1]} : vector<8x128xf32> to vector<8x32xf32>
    %272 = vector.extract_strided_slice %270 {offsets = [0, 32], sizes = [8, 32], strides = [1, 1]} : vector<8x128xf32> to vector<8x32xf32>
    %273 = vector.extract_strided_slice %270 {offsets = [0, 64], sizes = [8, 32], strides = [1, 1]} : vector<8x128xf32> to vector<8x32xf32>
    %cst_56 = arith.constant 2.000000e+00 : f32
    %274 = vector.broadcast %cst_56 : f32 to vector<8x32xf32>
    %275 = arith.mulf %274, %273 : vector<8x32xf32>
    %cst_57 = arith.constant 1.000000e+00 : f32
    %276 = vector.broadcast %cst_57 : f32 to vector<8x32xf32>
    %277 = arith.subf %275, %276 : vector<8x32xf32>
    %278 = vector.extract_strided_slice %270 {offsets = [0, 96], sizes = [8, 32], strides = [1, 1]} : vector<8x128xf32> to vector<8x32xf32>
    %279 = arith.mulf %272, %254 : vector<8x32xf32>
    %280 = arith.mulf %271, %277 : vector<8x32xf32>
    %281 = arith.addf %279, %280 : vector<8x32xf32>
    %282 = math.tanh %281 : vector<8x32xf32>
    %283 = arith.mulf %278, %282 : vector<8x32xf32>
    %c5_i32_58 = arith.constant 5 : i32
    %c2_i32_59 = arith.constant 2 : i32
    %284 = vector.broadcast %c5_i32_58 : i32 to vector<8x1xi32>
    %285 = vector.broadcast %c2_i32_59 : i32 to vector<8x1xi32>
    %286 = arith.select %43, %284, %285 : vector<8x1xi1>, vector<8x1xi32>
    %287 = arith.cmpi slt, %286, %40 : vector<8x1xi32>
    %c1_i32_60 = arith.constant 1 : i32
    %288 = vector.broadcast %c1_i32_60 : i32 to vector<8x1xi32>
    %289 = arith.subi %40, %288 : vector<8x1xi32>
    %290 = arith.cmpi eq, %286, %289 : vector<8x1xi32>
    %291 = vector.shape_cast %287 : vector<8x1xi1> to vector<8x1xi1>
    %292 = vector.broadcast %291 : vector<8x1xi1> to vector<8x32xi1>
    %293 = arith.select %292, %283, %251 : vector<8x32xi1>, vector<8x32xf32>
    %294 = vector.shape_cast %287 : vector<8x1xi1> to vector<8x1xi1>
    %295 = vector.broadcast %294 : vector<8x1xi1> to vector<8x32xi1>
    %296 = arith.select %295, %281, %254 : vector<8x32xi1>, vector<8x32xf32>
    %297 = vector.shape_cast %290 : vector<8x1xi1> to vector<8x1xi1>
    %298 = vector.broadcast %297 : vector<8x1xi1> to vector<8x32xi1>
    %299 = arith.select %298, %283, %257 : vector<8x32xi1>, vector<8x32xf32>
    %cst_61 = arith.constant dense<0.000000e+00> : vector<8x256xf32>
    %300 = tpu.matmul %293, %44, %cst_61 {dimension_numbers = #tpu.dot_dimension_numbers<[1], [0], [0], [1], [0, 0, 1, 1], [], []>} : vector<8x32xf32>, vector<32x256xf32>, vector<8x256xf32> -> vector<8x256xf32>
    %301 = vector.extract_strided_slice %300 {offsets = [0, 0], sizes = [8, 128], strides = [1, 1]} : vector<8x256xf32> to vector<8x128xf32>
    %302 = vector.extract_strided_slice %300 {offsets = [0, 128], sizes = [8, 128], strides = [1, 1]} : vector<8x256xf32> to vector<8x128xf32>
    %303 = vector.shape_cast %43 : vector<8x1xi1> to vector<8x1xi1>
    %304 = vector.broadcast %303 : vector<8x1xi1> to vector<8x128xi1>
    %305 = arith.select %304, %301, %302 : vector<8x128xi1>, vector<8x128xf32>
    %306 = vector.extract_strided_slice %39 {offsets = [48, 0], sizes = [8, 128], strides = [1, 1]} : vector<64x128xf32> to vector<8x128xf32>
    %307 = arith.addf %305, %306 : vector<8x128xf32>
    %308 = arith.negf %307 : vector<8x128xf32>
    %309 = math.exp %308 : vector<8x128xf32>
    %cst_62 = arith.constant 1.000000e+00 : f32
    %310 = vector.broadcast %cst_62 : f32 to vector<8x128xf32>
    %311 = arith.addf %310, %309 : vector<8x128xf32>
    %312 = arith.divf %310, %311 : vector<8x128xf32>
    %313 = vector.extract_strided_slice %312 {offsets = [0, 0], sizes = [8, 32], strides = [1, 1]} : vector<8x128xf32> to vector<8x32xf32>
    %314 = vector.extract_strided_slice %312 {offsets = [0, 32], sizes = [8, 32], strides = [1, 1]} : vector<8x128xf32> to vector<8x32xf32>
    %315 = vector.extract_strided_slice %312 {offsets = [0, 64], sizes = [8, 32], strides = [1, 1]} : vector<8x128xf32> to vector<8x32xf32>
    %cst_63 = arith.constant 2.000000e+00 : f32
    %316 = vector.broadcast %cst_63 : f32 to vector<8x32xf32>
    %317 = arith.mulf %316, %315 : vector<8x32xf32>
    %cst_64 = arith.constant 1.000000e+00 : f32
    %318 = vector.broadcast %cst_64 : f32 to vector<8x32xf32>
    %319 = arith.subf %317, %318 : vector<8x32xf32>
    %320 = vector.extract_strided_slice %312 {offsets = [0, 96], sizes = [8, 32], strides = [1, 1]} : vector<8x128xf32> to vector<8x32xf32>
    %321 = arith.mulf %314, %296 : vector<8x32xf32>
    %322 = arith.mulf %313, %319 : vector<8x32xf32>
    %323 = arith.addf %321, %322 : vector<8x32xf32>
    %324 = math.tanh %323 : vector<8x32xf32>
    %325 = arith.mulf %320, %324 : vector<8x32xf32>
    %c6_i32_65 = arith.constant 6 : i32
    %c1_i32_66 = arith.constant 1 : i32
    %326 = vector.broadcast %c6_i32_65 : i32 to vector<8x1xi32>
    %327 = vector.broadcast %c1_i32_66 : i32 to vector<8x1xi32>
    %328 = arith.select %43, %326, %327 : vector<8x1xi1>, vector<8x1xi32>
    %329 = arith.cmpi slt, %328, %40 : vector<8x1xi32>
    %c1_i32_67 = arith.constant 1 : i32
    %330 = vector.broadcast %c1_i32_67 : i32 to vector<8x1xi32>
    %331 = arith.subi %40, %330 : vector<8x1xi32>
    %332 = arith.cmpi eq, %328, %331 : vector<8x1xi32>
    %333 = vector.shape_cast %329 : vector<8x1xi1> to vector<8x1xi1>
    %334 = vector.broadcast %333 : vector<8x1xi1> to vector<8x32xi1>
    %335 = arith.select %334, %325, %293 : vector<8x32xi1>, vector<8x32xf32>
    %336 = vector.shape_cast %329 : vector<8x1xi1> to vector<8x1xi1>
    %337 = vector.broadcast %336 : vector<8x1xi1> to vector<8x32xi1>
    %338 = arith.select %337, %323, %296 : vector<8x32xi1>, vector<8x32xf32>
    %339 = vector.shape_cast %332 : vector<8x1xi1> to vector<8x1xi1>
    %340 = vector.broadcast %339 : vector<8x1xi1> to vector<8x32xi1>
    %341 = arith.select %340, %325, %299 : vector<8x32xi1>, vector<8x32xf32>
    %cst_68 = arith.constant dense<0.000000e+00> : vector<8x256xf32>
    %342 = tpu.matmul %335, %44, %cst_68 {dimension_numbers = #tpu.dot_dimension_numbers<[1], [0], [0], [1], [0, 0, 1, 1], [], []>} : vector<8x32xf32>, vector<32x256xf32>, vector<8x256xf32> -> vector<8x256xf32>
    %343 = vector.extract_strided_slice %342 {offsets = [0, 0], sizes = [8, 128], strides = [1, 1]} : vector<8x256xf32> to vector<8x128xf32>
    %344 = vector.extract_strided_slice %342 {offsets = [0, 128], sizes = [8, 128], strides = [1, 1]} : vector<8x256xf32> to vector<8x128xf32>
    %345 = vector.shape_cast %43 : vector<8x1xi1> to vector<8x1xi1>
    %346 = vector.broadcast %345 : vector<8x1xi1> to vector<8x128xi1>
    %347 = arith.select %346, %343, %344 : vector<8x128xi1>, vector<8x128xf32>
    %348 = vector.extract_strided_slice %39 {offsets = [56, 0], sizes = [8, 128], strides = [1, 1]} : vector<64x128xf32> to vector<8x128xf32>
    %349 = arith.addf %347, %348 : vector<8x128xf32>
    %350 = arith.negf %349 : vector<8x128xf32>
    %351 = math.exp %350 : vector<8x128xf32>
    %cst_69 = arith.constant 1.000000e+00 : f32
    %352 = vector.broadcast %cst_69 : f32 to vector<8x128xf32>
    %353 = arith.addf %352, %351 : vector<8x128xf32>
    %354 = arith.divf %352, %353 : vector<8x128xf32>
    %355 = vector.extract_strided_slice %354 {offsets = [0, 0], sizes = [8, 32], strides = [1, 1]} : vector<8x128xf32> to vector<8x32xf32>
    %356 = vector.extract_strided_slice %354 {offsets = [0, 32], sizes = [8, 32], strides = [1, 1]} : vector<8x128xf32> to vector<8x32xf32>
    %357 = vector.extract_strided_slice %354 {offsets = [0, 64], sizes = [8, 32], strides = [1, 1]} : vector<8x128xf32> to vector<8x32xf32>
    %cst_70 = arith.constant 2.000000e+00 : f32
    %358 = vector.broadcast %cst_70 : f32 to vector<8x32xf32>
    %359 = arith.mulf %358, %357 : vector<8x32xf32>
    %cst_71 = arith.constant 1.000000e+00 : f32
    %360 = vector.broadcast %cst_71 : f32 to vector<8x32xf32>
    %361 = arith.subf %359, %360 : vector<8x32xf32>
    %362 = vector.extract_strided_slice %354 {offsets = [0, 96], sizes = [8, 32], strides = [1, 1]} : vector<8x128xf32> to vector<8x32xf32>
    %363 = arith.mulf %356, %338 : vector<8x32xf32>
    %364 = arith.mulf %355, %361 : vector<8x32xf32>
    %365 = arith.addf %363, %364 : vector<8x32xf32>
    %366 = math.tanh %365 : vector<8x32xf32>
    %367 = arith.mulf %362, %366 : vector<8x32xf32>
    %c7_i32_72 = arith.constant 7 : i32
    %c0_i32_73 = arith.constant 0 : i32
    %368 = vector.broadcast %c7_i32_72 : i32 to vector<8x1xi32>
    %369 = vector.broadcast %c0_i32_73 : i32 to vector<8x1xi32>
    %370 = arith.select %43, %368, %369 : vector<8x1xi1>, vector<8x1xi32>
    %c1_i32_74 = arith.constant 1 : i32
    %371 = vector.broadcast %c1_i32_74 : i32 to vector<8x1xi32>
    %372 = arith.subi %40, %371 : vector<8x1xi32>
    %373 = arith.cmpi eq, %370, %372 : vector<8x1xi32>
    %374 = vector.shape_cast %373 : vector<8x1xi1> to vector<8x1xi1>
    %375 = vector.broadcast %374 : vector<8x1xi1> to vector<8x32xi1>
    %376 = arith.select %375, %367, %341 : vector<8x32xi1>, vector<8x32xf32>
    %c0_75 = arith.constant 0 : index
    %c0_76 = arith.constant 0 : index
    %377 = vector.load %arg8[%c0_75, %c0_76] : memref<64x128xf32, #tpu.memory_space<vmem>>, vector<32x128xf32>
    %cst_77 = arith.constant dense<0.000000e+00> : vector<8x128xf32>
    %378 = tpu.matmul %376, %377, %cst_77 {dimension_numbers = #tpu.dot_dimension_numbers<[1], [0], [0], [1], [0, 0, 1, 1], [], []>} : vector<8x32xf32>, vector<32x128xf32>, vector<8x128xf32> -> vector<8x128xf32>
    %c32 = arith.constant 32 : index
    %c0_78 = arith.constant 0 : index
    %379 = vector.load %arg8[%c32, %c0_78] : memref<64x128xf32, #tpu.memory_space<vmem>>, vector<32x128xf32>
    %cst_79 = arith.constant dense<0.000000e+00> : vector<8x128xf32>
    %380 = tpu.matmul %376, %379, %cst_79 {dimension_numbers = #tpu.dot_dimension_numbers<[1], [0], [0], [1], [0, 0, 1, 1], [], []>} : vector<8x32xf32>, vector<32x128xf32>, vector<8x128xf32> -> vector<8x128xf32>
    %c4_i32_80 = arith.constant 4 : i32
    %381 = tpu.dynamic_rotate %380 by %c4_i32_80 dim 0 : vector<8x128xf32>, i32 -> vector<8x128xf32>
    %382 = arith.addf %378, %381 : vector<8x128xf32>
    %c0_81 = arith.constant 0 : index
    %c0_82 = arith.constant 0 : index
    %383 = vector.load %arg9[%c0_81, %c0_82] : memref<1x128xf32, #tpu.memory_space<vmem>>, vector<1x128xf32>
    %384 = vector.broadcast %383 : vector<1x128xf32> to vector<8x128xf32>
    %385 = arith.addf %382, %384 : vector<8x128xf32>
    %c0_83 = arith.constant 0 : index
    %c0_84 = arith.constant 0 : index
    %386 = vector.load %arg10[%c0_83, %c0_84] : memref<8x128xf32, #tpu.memory_space<vmem>>, vector<8x128xf32>
    tpu.vector_store %arg10[%c0_83, %c0_84], %385 {strides = array<i32>} : memref<8x128xf32, #tpu.memory_space<vmem>>, vector<8x128xf32>,
    return
  }
}

</mosaic_0001>

<llo_original>
// kernel: tpu_custom_call.1
$region0: #{tpu_custom_call.1}
  #allocation0 [shape = 'u32[]', space=smem, size = 0x4, offset = 0x4, fixed_abs, tag = 'smem constant byte address 0x4 - core index']
  #allocation1 [shape = 'u32[144,128]{1,0:T(1,128)}', space=vmem, size = 0x12000, scoped, tag = 'internal scratch']
  %s0 = inlined_call_operand.vmem [shape: s32[64,1], index: 0, kind: input, shape index: {}]
  %s1 = inlined_call_operand.vmem [shape: s32[8,1], index: 1, kind: input, shape index: {}]
  %s2 = inlined_call_operand.vmem [shape: f32[64,32], index: 2, kind: input, shape index: {}]
  %s3 = inlined_call_operand.hbm [shape: f32[1,32], index: 3, kind: input, shape index: {}]
  %s4 = inlined_call_operand.hbm [shape: f32[1,32], index: 4, kind: input, shape index: {}]
  %s5 = inlined_call_operand.vmem [shape: f32[32,256], index: 5, kind: input, shape index: {}]
  %s6 = inlined_call_operand.hbm [shape: f32[1,256], index: 6, kind: input, shape index: {}]
  %s7 = inlined_call_operand.vmem [shape: f32[32,256], index: 7, kind: input, shape index: {}]
  %s8 = inlined_call_operand.vmem [shape: f32[64,128], index: 8, kind: input, shape index: {}]
  %s9 = inlined_call_operand.vmem [shape: f32[1,128], index: 9, kind: input, shape index: {}]
  %s10 = inlined_call_operand.hbm [shape: f32[8,128], index: 10, kind: output, shape index: {}]
  %s11 = sld [smem:[#allocation0]]
  $region62: #{tpu_custom_call.1} parent=0
    _
  %s13 = ssub.s32 1, %s11
  %s14 = scalar_select 0, %s13, %s11
  $region1: #{tpu_custom_call.1} parent=0
    #allocation2 [shape = 'u8[512]{0}', space=vmem, size = 0x400, scoped, tag = 'input window, operand 3, single buffered']
    #allocation3 [shape = 's32[1]{0}', space=sflag, size = 0x4, scoped, tag = 'scoped memory for tpu_custom_call.1']
    #allocation4 [shape = 's32[1]{0}', space=sflag, size = 0x4, scoped, tag = 'scoped memory for tpu_custom_call.1']
    #allocation5 [shape = 'u8[512]{0}', space=vmem, size = 0x400, scoped, tag = 'input window, operand 4, single buffered']
    #allocation6 [shape = 's32[1]{0}', space=sflag, size = 0x4, scoped, tag = 'scoped memory for tpu_custom_call.1']
    #allocation7 [shape = 'u8[1024]{0}', space=vmem, size = 0x400, scoped, tag = 'input window, operand 6, single buffered']
    #allocation8 [shape = 'u8[4096]{0}', space=vmem, size = 0x1000, scoped, tag = 'output window, operand 0, single buffered']
    %15 = vsyncpa [#allocation3], 0
    %16 = vsyncpa [#allocation6], 0
    %17 = vsyncpa [#allocation4], 0
    // Predicated region
    $region2: #{tpu_custom_call.1} parent=1 // pred_check
      _
    $region3: #{tpu_custom_call.1} parent=1 // pred_check_branch
      %19 = sbr.rel (0) target = $region5
    $region4: #{tpu_custom_call.1} parent=1 // pred_region
      _
    $region5: #{tpu_custom_call.1} parent=1 // pred_fallthru
      _
    // Predicated region
    $region6: #{tpu_custom_call.1} parent=1 // pred_check
      _
    $region7: #{tpu_custom_call.1} parent=1 // pred_check_branch
      %21 = sbr.rel (0) target = $region9
    $region8: #{tpu_custom_call.1} parent=1 // pred_region
      _
    $region9: #{tpu_custom_call.1} parent=1 // pred_fallthru
      _
    // Predicated region
    $region10: #{tpu_custom_call.1} parent=1 // pred_check
      _
    $region11: #{tpu_custom_call.1} parent=1 // pred_check_branch
      %23 = sbr.rel (0) target = $region13
    $region12: #{tpu_custom_call.1} parent=1 // pred_region
      _
    $region13: #{tpu_custom_call.1} parent=1 // pred_fallthru
      _
    // Predicated region
    $region14: #{tpu_custom_call.1} parent=1 // pred_check
      _
    $region15: #{tpu_custom_call.1} parent=1 // pred_check_branch
      %25 = sbr.rel (0) target = $region17
    $region16: #{tpu_custom_call.1} parent=1 // pred_region
      %s27 = ssub.s32 16, 16
      %28 = vsyncadd [#allocation3], %s27
      %s30 = sshll.u32 [#allocation2], 4
      %s31 = int_to_ptr.vmem [resolvable:$true] %s30
      %33 = dma.hbm_to_vmem [thread:$0]  %s3, 16, %s31, [#allocation3]
    $region17: #{tpu_custom_call.1} parent=1 // pred_fallthru
      _
    // Predicated region
    $region18: #{tpu_custom_call.1} parent=1 // pred_check
      _
    $region19: #{tpu_custom_call.1} parent=1 // pred_check_branch
      %35 = sbr.rel (0) target = $region21
    $region20: #{tpu_custom_call.1} parent=1 // pred_region
      %s37 = ssub.s32 16, 16
      %38 = vsyncadd [#allocation6], %s37
      %s40 = sshll.u32 [#allocation5], 4
      %s41 = int_to_ptr.vmem [resolvable:$true] %s40
      %43 = dma.hbm_to_vmem [thread:$0]  %s4, 16, %s41, [#allocation6]
    $region21: #{tpu_custom_call.1} parent=1 // pred_fallthru
      _
    // Predicated region
    $region22: #{tpu_custom_call.1} parent=1 // pred_check
      _
    $region23: #{tpu_custom_call.1} parent=1 // pred_check_branch
      %45 = sbr.rel (0) target = $region25
    $region24: #{tpu_custom_call.1} parent=1 // pred_region
      _
    $region25: #{tpu_custom_call.1} parent=1 // pred_fallthru
      _
    // Predicated region
    $region26: #{tpu_custom_call.1} parent=1 // pred_check
      _
    $region27: #{tpu_custom_call.1} parent=1 // pred_check_branch
      %47 = sbr.rel (0) target = $region29
    $region28: #{tpu_custom_call.1} parent=1 // pred_region
      %s49 = ssub.s32 32, 32
      %50 = vsyncadd [#allocation6], %s49
      %s52 = sshll.u32 [#allocation7], 4
      %s53 = int_to_ptr.vmem [resolvable:$true] %s52
      %55 = dma.hbm_to_vmem [thread:$0]  %s6, 32, %s53, [#allocation6]
    $region29: #{tpu_custom_call.1} parent=1 // pred_fallthru
      _
    // Predicated region
    $region30: #{tpu_custom_call.1} parent=1 // pred_check
      _
    $region31: #{tpu_custom_call.1} parent=1 // pred_check_branch
      %57 = sbr.rel (0) target = $region33
    $region32: #{tpu_custom_call.1} parent=1 // pred_region
      _
    $region33: #{tpu_custom_call.1} parent=1 // pred_fallthru
      _
    // Predicated region
    $region34: #{tpu_custom_call.1} parent=1 // pred_check
      _
    $region35: #{tpu_custom_call.1} parent=1 // pred_check_branch
      %59 = sbr.rel (0) target = $region37
    $region36: #{tpu_custom_call.1} parent=1 // pred_region
      _
    $region37: #{tpu_custom_call.1} parent=1 // pred_fallthru
      _
    // Predicated region
    $region38: #{tpu_custom_call.1} parent=1 // pred_check
      _
    $region39: #{tpu_custom_call.1} parent=1 // pred_check_branch
      %61 = sbr.rel (0) target = $region41
    $region40: #{tpu_custom_call.1} parent=1 // pred_region
      _
    $region41: #{tpu_custom_call.1} parent=1 // pred_fallthru
      _
    // Predicated region
    $region42: #{tpu_custom_call.1} parent=1 // pred_check
      _
    $region43: #{tpu_custom_call.1} parent=1 // pred_check_branch
      %63 = sbr.rel (0) target = $region45
    $region44: #{tpu_custom_call.1} parent=1 // pred_region
      %64 = dma.done [#allocation3], 16
    $region45: #{tpu_custom_call.1} parent=1 // pred_fallthru
      _
    // Predicated region
    $region46: #{tpu_custom_call.1} parent=1 // pred_check
      _
    $region47: #{tpu_custom_call.1} parent=1 // pred_check_branch
      %66 = sbr.rel (0) target = $region49
    $region48: #{tpu_custom_call.1} parent=1 // pred_region
      %67 = dma.done [#allocation6], 16
    $region49: #{tpu_custom_call.1} parent=1 // pred_fallthru
      _
    // Predicated region
    $region50: #{tpu_custom_call.1} parent=1 // pred_check
      _
    $region51: #{tpu_custom_call.1} parent=1 // pred_check_branch
      %69 = sbr.rel (0) target = $region53
    $region52: #{tpu_custom_call.1} parent=1 // pred_region
      %70 = dma.done [#allocation6], 32
    $region53: #{tpu_custom_call.1} parent=1 // pred_fallthru
      _
    %v71 = vld [vmem:[%s2] sm:$0xff]
    %v72 = vld [vmem:[%s2 + $0x8] sm:$0xff]
    %v73 = vld [vmem:[%s2 + $0x10] sm:$0xff]
    %v74 = vld [vmem:[%s2 + $0x18] sm:$0xff]
    %v75 = vld [vmem:[%s2 + $0x20] sm:$0xff]
    %v76 = vld [vmem:[%s2 + $0x28] sm:$0xff]
    %v77 = vld [vmem:[%s2 + $0x30] sm:$0xff]
    %v78 = vld [vmem:[%s2 + $0x38] sm:$0xff]
    %vm79 = vcmask 261120
    %v80 = vsel %vm79, %v71, 0.0
    %81 = vadd.xlane.f32.xlu0 %v80
    %v82 = vpop.xlane.xlu0 %81
    %v83 = vsel %vm79, %v72, 0.0
    %84 = vadd.xlane.f32.xlu0 %v83
    %v85 = vpop.xlane.xlu0 %84
    %v86 = vsel %vm79, %v73, 0.0
    %87 = vadd.xlane.f32.xlu0 %v86
    %v88 = vpop.xlane.xlu0 %87
    %v89 = vsel %vm79, %v74, 0.0
    %90 = vadd.xlane.f32.xlu0 %v89
    %v91 = vpop.xlane.xlu0 %90
    %v92 = vsel %vm79, %v75, 0.0
    %93 = vadd.xlane.f32.xlu0 %v92
    %v94 = vpop.xlane.xlu0 %93
    %v95 = vsel %vm79, %v76, 0.0
    %96 = vadd.xlane.f32.xlu0 %v95
    %v97 = vpop.xlane.xlu0 %96
    %v98 = vsel %vm79, %v77, 0.0
    %99 = vadd.xlane.f32.xlu0 %v98
    %v100 = vpop.xlane.xlu0 %99
    %v101 = vsel %vm79, %v78, 0.0
    %102 = vadd.xlane.f32.xlu0 %v101
    %v103 = vpop.xlane.xlu0 %102
    %v104 = vrcp.pop 32.0
    %v105 = vmul.f32 %v82, %v104
    %v106 = vmul.f32 %v85, %v104
    %v107 = vmul.f32 %v88, %v104
    %v108 = vmul.f32 %v91, %v104
    %v109 = vmul.f32 %v94, %v104
    %v110 = vmul.f32 %v97, %v104
    %v111 = vmul.f32 %v100, %v104
    %v112 = vmul.f32 %v103, %v104
    %v113 = vsub.f32 %v71, %v105
    %v114 = vsub.f32 %v72, %v106
    %v115 = vsub.f32 %v73, %v107
    %v116 = vsub.f32 %v74, %v108
    %v117 = vsub.f32 %v75, %v109
    %v118 = vsub.f32 %v76, %v110
    %v119 = vsub.f32 %v77, %v111
    %v120 = vsub.f32 %v78, %v112
    %v121 = vmul.f32 %v113, %v113
    %v122 = vmul.f32 %v114, %v114
    %v123 = vmul.f32 %v115, %v115
    %v124 = vmul.f32 %v116, %v116
    %v125 = vmul.f32 %v117, %v117
    %v126 = vmul.f32 %v118, %v118
    %v127 = vmul.f32 %v119, %v119
    %v128 = vmul.f32 %v120, %v120
    %v129 = vsel %vm79, %v121, 0.0
    %130 = vadd.xlane.f32.xlu0 %v129
    %v131 = vpop.xlane.xlu0 %130
    %v132 = vsel %vm79, %v122, 0.0
    %133 = vadd.xlane.f32.xlu0 %v132
    %v134 = vpop.xlane.xlu0 %133
    %v135 = vsel %vm79, %v123, 0.0
    %136 = vadd.xlane.f32.xlu0 %v135
    %v137 = vpop.xlane.xlu0 %136
    %v138 = vsel %vm79, %v124, 0.0
    %139 = vadd.xlane.f32.xlu0 %v138
    %v140 = vpop.xlane.xlu0 %139
    %v141 = vsel %vm79, %v125, 0.0
    %142 = vadd.xlane.f32.xlu0 %v141
    %v143 = vpop.xlane.xlu0 %142
    %v144 = vsel %vm79, %v126, 0.0
    %145 = vadd.xlane.f32.xlu0 %v144
    %v146 = vpop.xlane.xlu0 %145
    %v147 = vsel %vm79, %v127, 0.0
    %148 = vadd.xlane.f32.xlu0 %v147
    %v149 = vpop.xlane.xlu0 %148
    %v150 = vsel %vm79, %v128, 0.0
    %151 = vadd.xlane.f32.xlu0 %v150
    %v152 = vpop.xlane.xlu0 %151
    %v153 = vmul.f32 %v131, %v104
    %v154 = vmul.f32 %v134, %v104
    %v155 = vmul.f32 %v137, %v104
    %v156 = vmul.f32 %v140, %v104
    %v157 = vmul.f32 %v143, %v104
    %v158 = vmul.f32 %v146, %v104
    %v159 = vmul.f32 %v149, %v104
    %v160 = vmul.f32 %v152, %v104
    %v161 = vld [vmem:[#allocation2] sm:$0x1]
    %v162 = vadd.f32 %v153, 1e-12
    %v163 = vadd.f32 %v154, 1e-12
    %v164 = vadd.f32 %v155, 1e-12
    %v165 = vadd.f32 %v156, 1e-12
    %v166 = vadd.f32 %v157, 1e-12
    %v167 = vadd.f32 %v158, 1e-12
    %v168 = vadd.f32 %v159, 1e-12
    %v169 = vadd.f32 %v160, 1e-12
    %v170 = vrsqrt.pop %v162
    %v171 = vrsqrt.pop %v163
    %v172 = vrsqrt.pop %v164
    %v173 = vrsqrt.pop %v165
    %v174 = vrsqrt.pop %v166
    %v175 = vrsqrt.pop %v167
    %v176 = vrsqrt.pop %v168
    %v177 = vrsqrt.pop %v169
    %v178 = vmul.f32 %v113, %v170
    %v179 = vmul.f32 %v114, %v171
    %v180 = vmul.f32 %v115, %v172
    %v181 = vmul.f32 %v116, %v173
    %v182 = vmul.f32 %v117, %v174
    %v183 = vmul.f32 %v118, %v175
    %v184 = vmul.f32 %v119, %v176
    %v185 = vmul.f32 %v120, %v177
    %v187 = vlaneseq
    %v188 = vshrl.u32 %v187, 7
    %v189 = vsub.s32 0, %v188
    %v190 = vrot.slane %v161, %v189
    %v192 = vmul.f32 %v190, %v178
    %v193 = vmul.f32 %v190, %v179
    %v194 = vmul.f32 %v190, %v180
    %v195 = vmul.f32 %v190, %v181
    %v196 = vmul.f32 %v190, %v182
    %v197 = vmul.f32 %v190, %v183
    %v198 = vmul.f32 %v190, %v184
    %v199 = vmul.f32 %v190, %v185
    %v200 = vld [vmem:[#allocation5] sm:$0x1]
    %v202 = vlaneseq
    %v203 = vshrl.u32 %v202, 7
    %v204 = vsub.s32 0, %v203
    %v205 = vrot.slane %v200, %v204
    %v207 = vadd.f32 %v192, %v205
    %v208 = vadd.f32 %v193, %v205
    %v209 = vadd.f32 %v194, %v205
    %v210 = vadd.f32 %v195, %v205
    %v211 = vadd.f32 %v196, %v205
    %v212 = vadd.f32 %v197, %v205
    %v213 = vadd.f32 %v198, %v205
    %v214 = vadd.f32 %v199, %v205
    %v215 = vld [vmem:[%s5] sm:$0xff]
    %v216 = vld [vmem:[%s5 + $0x8] sm:$0xff]
    %v217 = vld [vmem:[%s5 + $0x10] sm:$0xff]
    %v218 = vld [vmem:[%s5 + $0x18] sm:$0xff]
    %v219 = vld [vmem:[%s5 + $0x20] sm:$0xff]
    %v220 = vld [vmem:[%s5 + $0x28] sm:$0xff]
    %v221 = vld [vmem:[%s5 + $0x30] sm:$0xff]
    %v222 = vld [vmem:[%s5 + $0x38] sm:$0xff]
    %v223 = vld [vmem:[#allocation7] sm:$0x3]
    %v225 = vlaneseq
    %v226 = vshrl.u32 %v225, 7
    %v227 = vsub.s32 0, %v226
    %v228 = vrot.slane %v223, %v227
    %v229 = vlaneseq
    %v230 = vshrl.u32 %v229, 7
    %v231 = vsub.s32 1, %v230
    %v232 = vrot.slane %v223, %v231
    %v236 = vsel %vm79, %v207, 0
    %v239 = vsel %vm79, %v208, 0
    %v242 = vsel %vm79, %v209, 0
    %v245 = vsel %vm79, %v210, 0
    %v248 = vsel %vm79, %v211, 0
    %v251 = vsel %vm79, %v212, 0
    %v254 = vsel %vm79, %v213, 0
    %v257 = vsel %vm79, %v214, 0
    %259 = vmatprep.subr.mxu0 %v216
    %260 = vmatpush1.msra.mxu0 %v215
    %261 = vmatprep.subr.mxu0 %v218
    %262 = vmatpush1.msra.mxu0 %v217
    %263 = vmatprep.subr.mxu0 %v220
    %264 = vmatpush1.msra.mxu0 %v219
    %265 = vmatprep.subr.mxu0 %v222
    %266 = vmatpush1.msra.mxu0 %v221
    %267 = vmatprep.subr.mxu0 0.0
    %268 = vmatpush1.msra.mxu0 0.0
    %269 = vmatprep.subr.mxu0 0.0
    %270 = vmatpush1.msra.mxu0 0.0
    %271 = vmatprep.subr.mxu0 0.0
    %272 = vmatpush1.msra.mxu0 0.0
    %273 = vmatprep.subr.mxu0 0.0
    %274 = vmatpush1.msra.mxu0 0.0
    %275 = vmatprep.subr.mxu0 0.0
    %276 = vmatpush1.msra.mxu0 0.0
    %277 = vmatprep.subr.mxu0 0.0
    %278 = vmatpush1.msra.mxu0 0.0
    %279 = vmatprep.subr.mxu0 0.0
    %280 = vmatpush1.msra.mxu0 0.0
    %281 = vmatprep.subr.mxu0 0.0
    %282 = vmatpush1.msra.mxu0 0.0
    %283 = vmatprep.subr.mxu0 0.0
    %284 = vmatpush1.msra.mxu0 0.0
    %285 = vmatprep.subr.mxu0 0.0
    %286 = vmatpush1.msra.mxu0 0.0
    %287 = vmatprep.subr.mxu0 0.0
    %288 = vmatpush1.msra.mxu0 0.0
    %289 = vmatprep.subr.mxu0 0.0
    %290 = vmatpush1.msra.mxu0 0.0
    %291 = vmatprep.subr.mxu0 0.0
    %292 = vmatpush1.msra.mxu0 0.0
    %293 = vmatprep.subr.mxu0 0.0
    %294 = vmatpush1.msra.mxu0 0.0
    %295 = vmatprep.subr.mxu0 0.0
    %296 = vmatpush1.msra.mxu0 0.0
    %297 = vmatprep.subr.mxu0 0.0
    %298 = vmatpush1.msra.mxu0 0.0
    %299 = vmatprep.subr.mxu0 0.0
    %300 = vmatpush1.msra.mxu0 0.0
    %301 = vmatprep.subr.mxu0 0.0
    %302 = vmatpush1.msra.mxu0 0.0
    %303 = vmatprep.subr.mxu0 0.0
    %304 = vmatpush1.msra.mxu0 0.0
    %305 = vmatprep.subr.mxu0 0.0
    %306 = vmatpush1.msra.mxu0 0.0
    %307 = vmatprep.subr.mxu0 0.0
    %308 = vmatpush1.msra.mxu0 0.0
    %309 = vmatprep.subr.mxu0 0.0
    %310 = vmatpush1.msra.mxu0 0.0
    %311 = vmatprep.subr.mxu0 0.0
    %312 = vmatpush1.msra.mxu0 0.0
    %313 = vmatprep.subr.mxu0 0.0
    %314 = vmatpush1.msra.mxu0 0.0
    %315 = vmatprep.subr.mxu0 0.0
    %316 = vmatpush1.msra.mxu0 0.0
    %317 = vmatprep.subr.mxu0 0.0
    %318 = vmatpush1.msra.mxu0 0.0
    %319 = vmatprep.subr.mxu0 0.0
    %320 = vmatpush1.msra.mxu0 0.0
    %321 = vmatprep.subr.mxu0 0.0
    %322 = vmatpush1.msra.mxu0 0.0
    %323 = vmatprep.mubr.f32.mxu0 0.0
    %324 = vmatmul.mubr.f32.gmra.mrb[0].mxu0 %v236
    %v325 = vpop.f32.mrb[0].mxu0
    %v326 = vadd.f32 %v228, %v325
    %v327 = vpop.f32.mrb[0].mxu0
    %v328 = vadd.f32 %v232, %v327
    %329 = vmatprep.mubr.f32.mxu0 0.0
    %330 = vmatmul.mubr.f32.gmra.mrb[0].mxu0 %v239
    %v331 = vpop.f32.mrb[0].mxu0
    %v332 = vadd.f32 %v228, %v331
    %v333 = vpop.f32.mrb[0].mxu0
    %v334 = vadd.f32 %v232, %v333
    %335 = vmatprep.mubr.f32.mxu0 0.0
    %336 = vmatmul.mubr.f32.gmra.mrb[0].mxu0 %v242
    %v337 = vpop.f32.mrb[0].mxu0
    %v338 = vadd.f32 %v228, %v337
    %v339 = vpop.f32.mrb[0].mxu0
    %v340 = vadd.f32 %v232, %v339
    %341 = vmatprep.mubr.f32.mxu0 0.0
    %342 = vmatmul.mubr.f32.gmra.mrb[0].mxu0 %v245
    %v343 = vpop.f32.mrb[0].mxu0
    %v344 = vadd.f32 %v228, %v343
    %v345 = vpop.f32.mrb[0].mxu0
    %v346 = vadd.f32 %v232, %v345
    %347 = vmatprep.mubr.f32.mxu0 0.0
    %348 = vmatmul.mubr.f32.gmra.mrb[0].mxu0 %v248
    %v349 = vpop.f32.mrb[0].mxu0
    %v350 = vadd.f32 %v228, %v349
    %v351 = vpop.f32.mrb[0].mxu0
    %v352 = vadd.f32 %v232, %v351
    %353 = vmatprep.mubr.f32.mxu0 0.0
    %354 = vmatmul.mubr.f32.gmra.mrb[0].mxu0 %v251
    %v355 = vpop.f32.mrb[0].mxu0
    %v356 = vadd.f32 %v228, %v355
    %v357 = vpop.f32.mrb[0].mxu0
    %v358 = vadd.f32 %v232, %v357
    %359 = vmatprep.mubr.f32.mxu0 0.0
    %360 = vmatmul.mubr.f32.gmra.mrb[0].mxu0 %v254
    %v361 = vpop.f32.mrb[0].mxu0
    %v362 = vadd.f32 %v228, %v361
    %v363 = vpop.f32.mrb[0].mxu0
    %v364 = vadd.f32 %v232, %v363
    %365 = vmatprep.mubr.f32.mxu0 0.0
    %366 = vmatmul.mubr.f32.gmra.mrb[0].mxu0 %v257
    %v367 = vpop.f32.mrb[0].mxu0
    %v368 = vadd.f32 %v228, %v367
    %v369 = vpop.f32.mrb[0].mxu0
    %v370 = vadd.f32 %v232, %v369
    %371 = vdwg.mxu0
    %v372 = vld [vmem:[%s0] sm:$0xff]
    %v373 = vld [vmem:[%s0 + $0x8] sm:$0xff]
    %v374 = vld [vmem:[%s0 + $0x10] sm:$0xff]
    %v375 = vld [vmem:[%s0 + $0x18] sm:$0xff]
    %v376 = vld [vmem:[%s0 + $0x20] sm:$0xff]
    %v377 = vld [vmem:[%s0 + $0x28] sm:$0xff]
    %v378 = vld [vmem:[%s0 + $0x30] sm:$0xff]
    %v379 = vld [vmem:[%s0 + $0x38] sm:$0xff]
    %vm380 = vcmp.gt.s32.totalorder %v372, 0
    %vm381 = vcmp.gt.s32.totalorder %v373, 0
    %vm382 = vcmp.gt.s32.totalorder %v374, 0
    %vm383 = vcmp.gt.s32.totalorder %v375, 0
    %vm384 = vcmp.gt.s32.totalorder %v376, 0
    %vm385 = vcmp.gt.s32.totalorder %v377, 0
    %vm386 = vcmp.gt.s32.totalorder %v378, 0
    %vm387 = vcmp.gt.s32.totalorder %v379, 0
    %v388 = vsel %vm380, 1, 0
    %v389 = vsel %vm381, 1, 0
    %v390 = vsel %vm382, 1, 0
    %v391 = vsel %vm383, 1, 0
    %v392 = vsel %vm384, 1, 0
    %v393 = vsel %vm385, 1, 0
    %v394 = vsel %vm386, 1, 0
    %v395 = vsel %vm387, 1, 0
    %396 = vset.pattern.permute.xlu0 0
    %397 = vperm.xlu0 %396, %v388
    %v398 = vpop.permute.xlu0 %397
    %399 = vset.pattern.permute.xlu0 0
    %400 = vperm.xlu0 %399, %v389
    %v401 = vpop.permute.xlu0 %400
    %402 = vset.pattern.permute.xlu0 0
    %403 = vperm.xlu0 %402, %v390
    %v404 = vpop.permute.xlu0 %403
    %405 = vset.pattern.permute.xlu0 0
    %406 = vperm.xlu0 %405, %v391
    %v407 = vpop.permute.xlu0 %406
    %408 = vset.pattern.permute.xlu0 0
    %409 = vperm.xlu0 %408, %v392
    %v410 = vpop.permute.xlu0 %409
    %411 = vset.pattern.permute.xlu0 0
    %412 = vperm.xlu0 %411, %v393
    %v413 = vpop.permute.xlu0 %412
    %414 = vset.pattern.permute.xlu0 0
    %415 = vperm.xlu0 %414, %v394
    %v416 = vpop.permute.xlu0 %415
    %417 = vset.pattern.permute.xlu0 0
    %418 = vperm.xlu0 %417, %v395
    %v419 = vpop.permute.xlu0 %418
    %vm420 = vcmp.eq.s32.totalorder %v398, 1
    %vm421 = vcmp.eq.s32.totalorder %v401, 1
    %vm422 = vcmp.eq.s32.totalorder %v404, 1
    %vm423 = vcmp.eq.s32.totalorder %v407, 1
    %vm424 = vcmp.eq.s32.totalorder %v410, 1
    %vm425 = vcmp.eq.s32.totalorder %v413, 1
    %vm426 = vcmp.eq.s32.totalorder %v416, 1
    %vm427 = vcmp.eq.s32.totalorder %v419, 1
    %v428 = vsel %vm420, %v326, %v328
    %v429 = vsel %vm421, %v332, %v334
    %v430 = vsel %vm422, %v338, %v340
    %v431 = vsel %vm423, %v344, %v346
    %v432 = vsel %vm424, %v350, %v352
    %v433 = vsel %vm425, %v356, %v358
    %v434 = vsel %vm426, %v362, %v364
    %v435 = vsel %vm427, %v368, %v370
    %v436 = vld [vmem:[%s1] sm:$0xff]
    %v437 = vld [vmem:[%s0] sm:$0xff]
    %vm438 = vcmp.gt.s32.totalorder %v437, 0
    %v439 = vld [vmem:[%s7] sm:$0xff]
    %v440 = vld [vmem:[%s7 + $0x8] sm:$0xff]
    %v441 = vld [vmem:[%s7 + $0x10] sm:$0xff]
    %v442 = vld [vmem:[%s7 + $0x18] sm:$0xff]
    %v443 = vld [vmem:[%s7 + $0x20] sm:$0xff]
    %v444 = vld [vmem:[%s7 + $0x28] sm:$0xff]
    %v445 = vld [vmem:[%s7 + $0x30] sm:$0xff]
    %v446 = vld [vmem:[%s7 + $0x38] sm:$0xff]
    %v448 = vsel %vm79, 0.0, 0
    %450 = vmatprep.subr.mxu0 %v440
    %451 = vmatpush1.msra.mxu0 %v439
    %452 = vmatprep.subr.mxu0 %v442
    %453 = vmatpush1.msra.mxu0 %v441
    %454 = vmatprep.subr.mxu0 %v444
    %455 = vmatpush1.msra.mxu0 %v443
    %456 = vmatprep.subr.mxu0 %v446
    %457 = vmatpush1.msra.mxu0 %v445
    %458 = vmatprep.subr.mxu0 0.0
    %459 = vmatpush1.msra.mxu0 0.0
    %460 = vmatprep.subr.mxu0 0.0
    %461 = vmatpush1.msra.mxu0 0.0
    %462 = vmatprep.subr.mxu0 0.0
    %463 = vmatpush1.msra.mxu0 0.0
    %464 = vmatprep.subr.mxu0 0.0
    %465 = vmatpush1.msra.mxu0 0.0
    %466 = vmatprep.subr.mxu0 0.0
    %467 = vmatpush1.msra.mxu0 0.0
    %468 = vmatprep.subr.mxu0 0.0
    %469 = vmatpush1.msra.mxu0 0.0
    %470 = vmatprep.subr.mxu0 0.0
    %471 = vmatpush1.msra.mxu0 0.0
    %472 = vmatprep.subr.mxu0 0.0
    %473 = vmatpush1.msra.mxu0 0.0
    %474 = vmatprep.subr.mxu0 0.0
    %475 = vmatpush1.msra.mxu0 0.0
    %476 = vmatprep.subr.mxu0 0.0
    %477 = vmatpush1.msra.mxu0 0.0
    %478 = vmatprep.subr.mxu0 0.0
    %479 = vmatpush1.msra.mxu0 0.0
    %480 = vmatprep.subr.mxu0 0.0
    %481 = vmatpush1.msra.mxu0 0.0
    %482 = vmatprep.subr.mxu0 0.0
    %483 = vmatpush1.msra.mxu0 0.0
    %484 = vmatprep.subr.mxu0 0.0
    %485 = vmatpush1.msra.mxu0 0.0
    %486 = vmatprep.subr.mxu0 0.0
    %487 = vmatpush1.msra.mxu0 0.0
    %488 = vmatprep.subr.mxu0 0.0
    %489 = vmatpush1.msra.mxu0 0.0
    %490 = vmatprep.subr.mxu0 0.0
    %491 = vmatpush1.msra.mxu0 0.0
    %492 = vmatprep.subr.mxu0 0.0
    %493 = vmatpush1.msra.mxu0 0.0
    %494 = vmatprep.subr.mxu0 0.0
    %495 = vmatpush1.msra.mxu0 0.0
    %496 = vmatprep.subr.mxu0 0.0
    %497 = vmatpush1.msra.mxu0 0.0
    %498 = vmatprep.subr.mxu0 0.0
    %499 = vmatpush1.msra.mxu0 0.0
    %500 = vmatprep.subr.mxu0 0.0
    %501 = vmatpush1.msra.mxu0 0.0
    %502 = vmatprep.subr.mxu0 0.0
    %503 = vmatpush1.msra.mxu0 0.0
    %504 = vmatprep.subr.mxu0 0.0
    %505 = vmatpush1.msra.mxu0 0.0
    %506 = vmatprep.subr.mxu0 0.0
    %507 = vmatpush1.msra.mxu0 0.0
    %508 = vmatprep.subr.mxu0 0.0
    %509 = vmatpush1.msra.mxu0 0.0
    %510 = vmatprep.subr.mxu0 0.0
    %511 = vmatpush1.msra.mxu0 0.0
    %512 = vmatprep.subr.mxu0 0.0
    %513 = vmatpush1.msra.mxu0 0.0
    %514 = vmatprep.mubr.f32.mxu0 0.0
    %515 = vmatmul.mubr.f32.gmra.mrb[0].mxu0 %v448
    %v516 = vpop.f32.mrb[0].mxu0
    %v517 = vadd.f32 0.0, %v516
    %v518 = vpop.f32.mrb[0].mxu0
    %v519 = vadd.f32 0.0, %v518
    %520 = vdwg.mxu0
    %v521 = vsel %vm438, 1, 0
    %522 = vset.pattern.permute.xlu0 0
    %523 = vperm.xlu0 %522, %v521
    %v524 = vpop.permute.xlu0 %523
    %vm525 = vcmp.eq.s32.totalorder %v524, 1
    %v526 = vsel %vm525, %v517, %v519
    %v527 = vadd.f32 %v526, %v428
    %v528 = vxor.u32 %v527, 2147483648
    %v529 = vmul.f32 %v528, 1.442695
    %v530 = vpow.pop %v529
    %v531 = vadd.f32 %v530, 1.0
    %v532 = vrcp.pop %v531
    %v533 = vmul.f32 1.0, %v532
    %v534 = vmul.f32 %v533, 2.0
    %v535 = vsub.f32 %v534, 1.0
    %v536 = vmul.f32 %v533, 0.0
    %538 = vrot.lane.b32.xlu0 %v535, 64
    %v539 = vpop.permute.xlu0 %538
    %v541 = vmul.f32 %v533, %v539
    %543 = vrot.lane.b32.xlu0 %v541, 32
    %v544 = vpop.permute.xlu0 %543
    %v546 = vadd.f32 %v536, %v544
    %v547 = vtanh.pop %v546
    %549 = vrot.lane.b32.xlu0 %v547, 64
    %v550 = vpop.permute.xlu0 %549
    %v552 = vmul.f32 %v533, %v550
    %v553 = vsel %vm438, 0, 7
    %vm554 = vcmp.lt.s32.totalorder %v553, %v436
    %v555 = vsub.s32 %v436, 1
    %vm556 = vcmp.eq.s32.totalorder %v553, %v555
    %v557 = vsel %vm554, 1, 0
    %558 = vset.pattern.permute.xlu0 0
    %559 = vperm.xlu0 %558, %v557
    %v560 = vpop.permute.xlu0 %559
    %vm561 = vcmp.eq.s32.totalorder %v560, 1
    %v562 = vsel %vm561, %v552, 0.0
    %v563 = vsel %vm561, %v546, 0.0
    %v564 = vsel %vm556, 1, 0
    %565 = vset.pattern.permute.xlu0 0
    %566 = vperm.xlu0 %565, %v564
    %v567 = vpop.permute.xlu0 %566
    %vm568 = vcmp.eq.s32.totalorder %v567, 1
    %v569 = vsel %vm568, %v552, 0.0
    %571 = vrot.lane.b32.xlu0 %v562, 32
    %v572 = vpop.permute.xlu0 %571
    %v573 = vsel %vm79, %v572, 0
    %575 = vmatprep.subr.mxu0 %v440
    %576 = vmatpush1.msra.mxu0 %v439
    %577 = vmatprep.subr.mxu0 %v442
    %578 = vmatpush1.msra.mxu0 %v441
    %579 = vmatprep.subr.mxu0 %v444
    %580 = vmatpush1.msra.mxu0 %v443
    %581 = vmatprep.subr.mxu0 %v446
    %582 = vmatpush1.msra.mxu0 %v445
    %583 = vmatprep.subr.mxu0 0.0
    %584 = vmatpush1.msra.mxu0 0.0
    %585 = vmatprep.subr.mxu0 0.0
    %586 = vmatpush1.msra.mxu0 0.0
    %587 = vmatprep.subr.mxu0 0.0
    %588 = vmatpush1.msra.mxu0 0.0
    %589 = vmatprep.subr.mxu0 0.0
    %590 = vmatpush1.msra.mxu0 0.0
    %591 = vmatprep.subr.mxu0 0.0
    %592 = vmatpush1.msra.mxu0 0.0
    %593 = vmatprep.subr.mxu0 0.0
    %594 = vmatpush1.msra.mxu0 0.0
    %595 = vmatprep.subr.mxu0 0.0
    %596 = vmatpush1.msra.mxu0 0.0
    %597 = vmatprep.subr.mxu0 0.0
    %598 = vmatpush1.msra.mxu0 0.0
    %599 = vmatprep.subr.mxu0 0.0
    %600 = vmatpush1.msra.mxu0 0.0
    %601 = vmatprep.subr.mxu0 0.0
    %602 = vmatpush1.msra.mxu0 0.0
    %603 = vmatprep.subr.mxu0 0.0
    %604 = vmatpush1.msra.mxu0 0.0
    %605 = vmatprep.subr.mxu0 0.0
    %606 = vmatpush1.msra.mxu0 0.0
    %607 = vmatprep.subr.mxu0 0.0
    %608 = vmatpush1.msra.mxu0 0.0
    %609 = vmatprep.subr.mxu0 0.0
    %610 = vmatpush1.msra.mxu0 0.0
    %611 = vmatprep.subr.mxu0 0.0
    %612 = vmatpush1.msra.mxu0 0.0
    %613 = vmatprep.subr.mxu0 0.0
    %614 = vmatpush1.msra.mxu0 0.0
    %615 = vmatprep.subr.mxu0 0.0
    %616 = vmatpush1.msra.mxu0 0.0
    %617 = vmatprep.subr.mxu0 0.0
    %618 = vmatpush1.msra.mxu0 0.0
    %619 = vmatprep.subr.mxu0 0.0
    %620 = vmatpush1.msra.mxu0 0.0
    %621 = vmatprep.subr.mxu0 0.0
    %622 = vmatpush1.msra.mxu0 0.0
    %623 = vmatprep.subr.mxu0 0.0
    %624 = vmatpush1.msra.mxu0 0.0
    %625 = vmatprep.subr.mxu0 0.0
    %626 = vmatpush1.msra.mxu0 0.0
    %627 = vmatprep.subr.mxu0 0.0
    %628 = vmatpush1.msra.mxu0 0.0
    %629 = vmatprep.subr.mxu0 0.0
    %630 = vmatpush1.msra.mxu0 0.0
    %631 = vmatprep.subr.mxu0 0.0
    %632 = vmatpush1.msra.mxu0 0.0
    %633 = vmatprep.subr.mxu0 0.0
    %634 = vmatpush1.msra.mxu0 0.0
    %635 = vmatprep.subr.mxu0 0.0
    %636 = vmatpush1.msra.mxu0 0.0
    %637 = vmatprep.subr.mxu0 0.0
    %638 = vmatpush1.msra.mxu0 0.0
    %639 = vmatprep.mubr.f32.mxu0 0.0
    %640 = vmatmul.mubr.f32.gmra.mrb[0].mxu0 %v573
    %v641 = vpop.f32.mrb[0].mxu0
    %v642 = vadd.f32 0.0, %v641
    %v643 = vpop.f32.mrb[0].mxu0
    %v644 = vadd.f32 0.0, %v643
    %645 = vdwg.mxu0
    %v646 = vsel %vm525, %v642, %v644
    %v647 = vadd.f32 %v646, %v429
    %v648 = vxor.u32 %v647, 2147483648
    %v649 = vmul.f32 %v648, 1.442695
    %v650 = vpow.pop %v649
    %v651 = vadd.f32 %v650, 1.0
    %v652 = vrcp.pop %v651
    %v653 = vmul.f32 1.0, %v652
    %v654 = vmul.f32 %v653, 2.0
    %v655 = vsub.f32 %v654, 1.0
    %v656 = vmul.f32 %v653, %v563
    %658 = vrot.lane.b32.xlu0 %v655, 64
    %v659 = vpop.permute.xlu0 %658
    %v661 = vmul.f32 %v653, %v659
    %663 = vrot.lane.b32.xlu0 %v661, 32
    %v664 = vpop.permute.xlu0 %663
    %v666 = vadd.f32 %v656, %v664
    %v667 = vtanh.pop %v666
    %669 = vrot.lane.b32.xlu0 %v667, 64
    %v670 = vpop.permute.xlu0 %669
    %v672 = vmul.f32 %v653, %v670
    %v673 = vsel %vm438, 1, 6
    %vm674 = vcmp.lt.s32.totalorder %v673, %v436
    %vm675 = vcmp.eq.s32.totalorder %v673, %v555
    %v676 = vsel %vm674, 1, 0
    %677 = vset.pattern.permute.xlu0 0
    %678 = vperm.xlu0 %677, %v676
    %v679 = vpop.permute.xlu0 %678
    %vm680 = vcmp.eq.s32.totalorder %v679, 1
    %v681 = vsel %vm680, %v672, %v562
    %v682 = vsel %vm680, %v666, %v563
    %v683 = vsel %vm675, 1, 0
    %684 = vset.pattern.permute.xlu0 0
    %685 = vperm.xlu0 %684, %v683
    %v686 = vpop.permute.xlu0 %685
    %vm687 = vcmp.eq.s32.totalorder %v686, 1
    %v688 = vsel %vm687, %v672, %v569
    %690 = vrot.lane.b32.xlu0 %v681, 32
    %v691 = vpop.permute.xlu0 %690
    %v692 = vsel %vm79, %v691, 0
    %694 = vmatprep.subr.mxu0 %v440
    %695 = vmatpush1.msra.mxu0 %v439
    %696 = vmatprep.subr.mxu0 %v442
    %697 = vmatpush1.msra.mxu0 %v441
    %698 = vmatprep.subr.mxu0 %v444
    %699 = vmatpush1.msra.mxu0 %v443
    %700 = vmatprep.subr.mxu0 %v446
    %701 = vmatpush1.msra.mxu0 %v445
    %702 = vmatprep.subr.mxu0 0.0
    %703 = vmatpush1.msra.mxu0 0.0
    %704 = vmatprep.subr.mxu0 0.0
    %705 = vmatpush1.msra.mxu0 0.0
    %706 = vmatprep.subr.mxu0 0.0
    %707 = vmatpush1.msra.mxu0 0.0
    %708 = vmatprep.subr.mxu0 0.0
    %709 = vmatpush1.msra.mxu0 0.0
    %710 = vmatprep.subr.mxu0 0.0
    %711 = vmatpush1.msra.mxu0 0.0
    %712 = vmatprep.subr.mxu0 0.0
    %713 = vmatpush1.msra.mxu0 0.0
    %714 = vmatprep.subr.mxu0 0.0
    %715 = vmatpush1.msra.mxu0 0.0
    %716 = vmatprep.subr.mxu0 0.0
    %717 = vmatpush1.msra.mxu0 0.0
    %718 = vmatprep.subr.mxu0 0.0
    %719 = vmatpush1.msra.mxu0 0.0
    %720 = vmatprep.subr.mxu0 0.0
    %721 = vmatpush1.msra.mxu0 0.0
    %722 = vmatprep.subr.mxu0 0.0
    %723 = vmatpush1.msra.mxu0 0.0
    %724 = vmatprep.subr.mxu0 0.0
    %725 = vmatpush1.msra.mxu0 0.0
    %726 = vmatprep.subr.mxu0 0.0
    %727 = vmatpush1.msra.mxu0 0.0
    %728 = vmatprep.subr.mxu0 0.0
    %729 = vmatpush1.msra.mxu0 0.0
    %730 = vmatprep.subr.mxu0 0.0
    %731 = vmatpush1.msra.mxu0 0.0
    %732 = vmatprep.subr.mxu0 0.0
    %733 = vmatpush1.msra.mxu0 0.0
    %734 = vmatprep.subr.mxu0 0.0
    %735 = vmatpush1.msra.mxu0 0.0
    %736 = vmatprep.subr.mxu0 0.0
    %737 = vmatpush1.msra.mxu0 0.0
    %738 = vmatprep.subr.mxu0 0.0
    %739 = vmatpush1.msra.mxu0 0.0
    %740 = vmatprep.subr.mxu0 0.0
    %741 = vmatpush1.msra.mxu0 0.0
    %742 = vmatprep.subr.mxu0 0.0
    %743 = vmatpush1.msra.mxu0 0.0
    %744 = vmatprep.subr.mxu0 0.0
    %745 = vmatpush1.msra.mxu0 0.0
    %746 = vmatprep.subr.mxu0 0.0
    %747 = vmatpush1.msra.mxu0 0.0
    %748 = vmatprep.subr.mxu0 0.0
    %749 = vmatpush1.msra.mxu0 0.0
    %750 = vmatprep.subr.mxu0 0.0
    %751 = vmatpush1.msra.mxu0 0.0
    %752 = vmatprep.subr.mxu0 0.0
    %753 = vmatpush1.msra.mxu0 0.0
    %754 = vmatprep.subr.mxu0 0.0
    %755 = vmatpush1.msra.mxu0 0.0
    %756 = vmatprep.subr.mxu0 0.0
    %757 = vmatpush1.msra.mxu0 0.0
    %758 = vmatprep.mubr.f32.mxu0 0.0
    %759 = vmatmul.mubr.f32.gmra.mrb[0].mxu0 %v692
    %v760 = vpop.f32.mrb[0].mxu0
    %v761 = vadd.f32 0.0, %v760
    %v762 = vpop.f32.mrb[0].mxu0
    %v763 = vadd.f32 0.0, %v762
    %764 = vdwg.mxu0
    %v765 = vsel %vm525, %v761, %v763
    %v766 = vadd.f32 %v765, %v430
    %v767 = vxor.u32 %v766, 2147483648
    %v768 = vmul.f32 %v767, 1.442695
    %v769 = vpow.pop %v768
    %v770 = vadd.f32 %v769, 1.0
    %v771 = vrcp.pop %v770
    %v772 = vmul.f32 1.0, %v771
    %v773 = vmul.f32 %v772, 2.0
    %v774 = vsub.f32 %v773, 1.0
    %v775 = vmul.f32 %v772, %v682
    %777 = vrot.lane.b32.xlu0 %v774, 64
    %v778 = vpop.permute.xlu0 %777
    %v780 = vmul.f32 %v772, %v778
    %782 = vrot.lane.b32.xlu0 %v780, 32
    %v783 = vpop.permute.xlu0 %782
    %v785 = vadd.f32 %v775, %v783
    %v786 = vtanh.pop %v785
    %788 = vrot.lane.b32.xlu0 %v786, 64
    %v789 = vpop.permute.xlu0 %788
    %v791 = vmul.f32 %v772, %v789
    %v792 = vsel %vm438, 2, 5
    %vm793 = vcmp.lt.s32.totalorder %v792, %v436
    %vm794 = vcmp.eq.s32.totalorder %v792, %v555
    %v795 = vsel %vm793, 1, 0
    %796 = vset.pattern.permute.xlu0 0
    %797 = vperm.xlu0 %796, %v795
    %v798 = vpop.permute.xlu0 %797
    %vm799 = vcmp.eq.s32.totalorder %v798, 1
    %v800 = vsel %vm799, %v791, %v681
    %v801 = vsel %vm799, %v785, %v682
    %v802 = vsel %vm794, 1, 0
    %803 = vset.pattern.permute.xlu0 0
    %804 = vperm.xlu0 %803, %v802
    %v805 = vpop.permute.xlu0 %804
    %vm806 = vcmp.eq.s32.totalorder %v805, 1
    %v807 = vsel %vm806, %v791, %v688
    %809 = vrot.lane.b32.xlu0 %v800, 32
    %v810 = vpop.permute.xlu0 %809
    %v811 = vsel %vm79, %v810, 0
    %813 = vmatprep.subr.mxu0 %v440
    %814 = vmatpush1.msra.mxu0 %v439
    %815 = vmatprep.subr.mxu0 %v442
    %816 = vmatpush1.msra.mxu0 %v441
    %817 = vmatprep.subr.mxu0 %v444
    %818 = vmatpush1.msra.mxu0 %v443
    %819 = vmatprep.subr.mxu0 %v446
    %820 = vmatpush1.msra.mxu0 %v445
    %821 = vmatprep.subr.mxu0 0.0
    %822 = vmatpush1.msra.mxu0 0.0
    %823 = vmatprep.subr.mxu0 0.0
    %824 = vmatpush1.msra.mxu0 0.0
    %825 = vmatprep.subr.mxu0 0.0
    %826 = vmatpush1.msra.mxu0 0.0
    %827 = vmatprep.subr.mxu0 0.0
    %828 = vmatpush1.msra.mxu0 0.0
    %829 = vmatprep.subr.mxu0 0.0
    %830 = vmatpush1.msra.mxu0 0.0
    %831 = vmatprep.subr.mxu0 0.0
    %832 = vmatpush1.msra.mxu0 0.0
    %833 = vmatprep.subr.mxu0 0.0
    %834 = vmatpush1.msra.mxu0 0.0
    %835 = vmatprep.subr.mxu0 0.0
    %836 = vmatpush1.msra.mxu0 0.0
    %837 = vmatprep.subr.mxu0 0.0
    %838 = vmatpush1.msra.mxu0 0.0
    %839 = vmatprep.subr.mxu0 0.0
    %840 = vmatpush1.msra.mxu0 0.0
    %841 = vmatprep.subr.mxu0 0.0
    %842 = vmatpush1.msra.mxu0 0.0
    %843 = vmatprep.subr.mxu0 0.0
    %844 = vmatpush1.msra.mxu0 0.0
    %845 = vmatprep.subr.mxu0 0.0
    %846 = vmatpush1.msra.mxu0 0.0
    %847 = vmatprep.subr.mxu0 0.0
    %848 = vmatpush1.msra.mxu0 0.0
    %849 = vmatprep.subr.mxu0 0.0
    %850 = vmatpush1.msra.mxu0 0.0
    %851 = vmatprep.subr.mxu0 0.0
    %852 = vmatpush1.msra.mxu0 0.0
    %853 = vmatprep.subr.mxu0 0.0
    %854 = vmatpush1.msra.mxu0 0.0
    %855 = vmatprep.subr.mxu0 0.0
    %856 = vmatpush1.msra.mxu0 0.0
    %857 = vmatprep.subr.mxu0 0.0
    %858 = vmatpush1.msra.mxu0 0.0
    %859 = vmatprep.subr.mxu0 0.0
    %860 = vmatpush1.msra.mxu0 0.0
    %861 = vmatprep.subr.mxu0 0.0
    %862 = vmatpush1.msra.mxu0 0.0
    %863 = vmatprep.subr.mxu0 0.0
    %864 = vmatpush1.msra.mxu0 0.0
    %865 = vmatprep.subr.mxu0 0.0
    %866 = vmatpush1.msra.mxu0 0.0
    %867 = vmatprep.subr.mxu0 0.0
    %868 = vmatpush1.msra.mxu0 0.0
    %869 = vmatprep.subr.mxu0 0.0
    %870 = vmatpush1.msra.mxu0 0.0
    %871 = vmatprep.subr.mxu0 0.0
    %872 = vmatpush1.msra.mxu0 0.0
    %873 = vmatprep.subr.mxu0 0.0
    %874 = vmatpush1.msra.mxu0 0.0
    %875 = vmatprep.subr.mxu0 0.0
    %876 = vmatpush1.msra.mxu0 0.0
    %877 = vmatprep.mubr.f32.mxu0 0.0
    %878 = vmatmul.mubr.f32.gmra.mrb[0].mxu0 %v811
    %v879 = vpop.f32.mrb[0].mxu0
    %v880 = vadd.f32 0.0, %v879
    %v881 = vpop.f32.mrb[0].mxu0
    %v882 = vadd.f32 0.0, %v881
    %883 = vdwg.mxu0
    %v884 = vsel %vm525, %v880, %v882
    %v885 = vadd.f32 %v884, %v431
    %v886 = vxor.u32 %v885, 2147483648
    %v887 = vmul.f32 %v886, 1.442695
    %v888 = vpow.pop %v887
    %v889 = vadd.f32 %v888, 1.0
    %v890 = vrcp.pop %v889
    %v891 = vmul.f32 1.0, %v890
    %v892 = vmul.f32 %v891, 2.0
    %v893 = vsub.f32 %v892, 1.0
    %v894 = vmul.f32 %v891, %v801
    %896 = vrot.lane.b32.xlu0 %v893, 64
    %v897 = vpop.permute.xlu0 %896
    %v899 = vmul.f32 %v891, %v897
    %901 = vrot.lane.b32.xlu0 %v899, 32
    %v902 = vpop.permute.xlu0 %901
    %v904 = vadd.f32 %v894, %v902
    %v905 = vtanh.pop %v904
    %907 = vrot.lane.b32.xlu0 %v905, 64
    %v908 = vpop.permute.xlu0 %907
    %v910 = vmul.f32 %v891, %v908
    %v911 = vsel %vm438, 3, 4
    %vm912 = vcmp.lt.s32.totalorder %v911, %v436
    %vm913 = vcmp.eq.s32.totalorder %v911, %v555
    %v914 = vsel %vm912, 1, 0
    %915 = vset.pattern.permute.xlu0 0
    %916 = vperm.xlu0 %915, %v914
    %v917 = vpop.permute.xlu0 %916
    %vm918 = vcmp.eq.s32.totalorder %v917, 1
    %v919 = vsel %vm918, %v910, %v800
    %v920 = vsel %vm918, %v904, %v801
    %v921 = vsel %vm913, 1, 0
    %922 = vset.pattern.permute.xlu0 0
    %923 = vperm.xlu0 %922, %v921
    %v924 = vpop.permute.xlu0 %923
    %vm925 = vcmp.eq.s32.totalorder %v924, 1
    %v926 = vsel %vm925, %v910, %v807
    %928 = vrot.lane.b32.xlu0 %v919, 32
    %v929 = vpop.permute.xlu0 %928
    %v930 = vsel %vm79, %v929, 0
    %932 = vmatprep.subr.mxu0 %v440
    %933 = vmatpush1.msra.mxu0 %v439
    %934 = vmatprep.subr.mxu0 %v442
    %935 = vmatpush1.msra.mxu0 %v441
    %936 = vmatprep.subr.mxu0 %v444
    %937 = vmatpush1.msra.mxu0 %v443
    %938 = vmatprep.subr.mxu0 %v446
    %939 = vmatpush1.msra.mxu0 %v445
    %940 = vmatprep.subr.mxu0 0.0
    %941 = vmatpush1.msra.mxu0 0.0
    %942 = vmatprep.subr.mxu0 0.0
    %943 = vmatpush1.msra.mxu0 0.0
    %944 = vmatprep.subr.mxu0 0.0
    %945 = vmatpush1.msra.mxu0 0.0
    %946 = vmatprep.subr.mxu0 0.0
    %947 = vmatpush1.msra.mxu0 0.0
    %948 = vmatprep.subr.mxu0 0.0
    %949 = vmatpush1.msra.mxu0 0.0
    %950 = vmatprep.subr.mxu0 0.0
    %951 = vmatpush1.msra.mxu0 0.0
    %952 = vmatprep.subr.mxu0 0.0
    %953 = vmatpush1.msra.mxu0 0.0
    %954 = vmatprep.subr.mxu0 0.0
    %955 = vmatpush1.msra.mxu0 0.0
    %956 = vmatprep.subr.mxu0 0.0
    %957 = vmatpush1.msra.mxu0 0.0
    %958 = vmatprep.subr.mxu0 0.0
    %959 = vmatpush1.msra.mxu0 0.0
    %960 = vmatprep.subr.mxu0 0.0
    %961 = vmatpush1.msra.mxu0 0.0
    %962 = vmatprep.subr.mxu0 0.0
    %963 = vmatpush1.msra.mxu0 0.0
    %964 = vmatprep.subr.mxu0 0.0
    %965 = vmatpush1.msra.mxu0 0.0
    %966 = vmatprep.subr.mxu0 0.0
    %967 = vmatpush1.msra.mxu0 0.0
    %968 = vmatprep.subr.mxu0 0.0
    %969 = vmatpush1.msra.mxu0 0.0
    %970 = vmatprep.subr.mxu0 0.0
    %971 = vmatpush1.msra.mxu0 0.0
    %972 = vmatprep.subr.mxu0 0.0
    %973 = vmatpush1.msra.mxu0 0.0
    %974 = vmatprep.subr.mxu0 0.0
    %975 = vmatpush1.msra.mxu0 0.0
    %976 = vmatprep.subr.mxu0 0.0
    %977 = vmatpush1.msra.mxu0 0.0
    %978 = vmatprep.subr.mxu0 0.0
    %979 = vmatpush1.msra.mxu0 0.0
    %980 = vmatprep.subr.mxu0 0.0
    %981 = vmatpush1.msra.mxu0 0.0
    %982 = vmatprep.subr.mxu0 0.0
    %983 = vmatpush1.msra.mxu0 0.0
    %984 = vmatprep.subr.mxu0 0.0
    %985 = vmatpush1.msra.mxu0 0.0
    %986 = vmatprep.subr.mxu0 0.0
    %987 = vmatpush1.msra.mxu0 0.0
    %988 = vmatprep.subr.mxu0 0.0
    %989 = vmatpush1.msra.mxu0 0.0
    %990 = vmatprep.subr.mxu0 0.0
    %991 = vmatpush1.msra.mxu0 0.0
    %992 = vmatprep.subr.mxu0 0.0
    %993 = vmatpush1.msra.mxu0 0.0
    %994 = vmatprep.subr.mxu0 0.0
    %995 = vmatpush1.msra.mxu0 0.0
    %996 = vmatprep.mubr.f32.mxu0 0.0
    %997 = vmatmul.mubr.f32.gmra.mrb[0].mxu0 %v930
    %v998 = vpop.f32.mrb[0].mxu0
    %v999 = vadd.f32 0.0, %v998
    %v1000 = vpop.f32.mrb[0].mxu0
    %v1001 = vadd.f32 0.0, %v1000
    %1002 = vdwg.mxu0
    %v1003 = vsel %vm525, %v999, %v1001
    %v1004 = vadd.f32 %v1003, %v432
    %v1005 = vxor.u32 %v1004, 2147483648
    %v1006 = vmul.f32 %v1005, 1.442695
    %v1007 = vpow.pop %v1006
    %v1008 = vadd.f32 %v1007, 1.0
    %v1009 = vrcp.pop %v1008
    %v1010 = vmul.f32 1.0, %v1009
    %v1011 = vmul.f32 %v1010, 2.0
    %v1012 = vsub.f32 %v1011, 1.0
    %v1013 = vmul.f32 %v1010, %v920
    %1015 = vrot.lane.b32.xlu0 %v1012, 64
    %v1016 = vpop.permute.xlu0 %1015
    %v1018 = vmul.f32 %v1010, %v1016
    %1020 = vrot.lane.b32.xlu0 %v1018, 32
    %v1021 = vpop.permute.xlu0 %1020
    %v1023 = vadd.f32 %v1013, %v1021
    %v1024 = vtanh.pop %v1023
    %1026 = vrot.lane.b32.xlu0 %v1024, 64
    %v1027 = vpop.permute.xlu0 %1026
    %v1029 = vmul.f32 %v1010, %v1027
    %v1030 = vsel %vm438, 4, 3
    %vm1031 = vcmp.lt.s32.totalorder %v1030, %v436
    %vm1032 = vcmp.eq.s32.totalorder %v1030, %v555
    %v1033 = vsel %vm1031, 1, 0
    %1034 = vset.pattern.permute.xlu0 0
    %1035 = vperm.xlu0 %1034, %v1033
    %v1036 = vpop.permute.xlu0 %1035
    %vm1037 = vcmp.eq.s32.totalorder %v1036, 1
    %v1038 = vsel %vm1037, %v1029, %v919
    %v1039 = vsel %vm1037, %v1023, %v920
    %v1040 = vsel %vm1032, 1, 0
    %1041 = vset.pattern.permute.xlu0 0
    %1042 = vperm.xlu0 %1041, %v1040
    %v1043 = vpop.permute.xlu0 %1042
    %vm1044 = vcmp.eq.s32.totalorder %v1043, 1
    %v1045 = vsel %vm1044, %v1029, %v926
    %1047 = vrot.lane.b32.xlu0 %v1038, 32
    %v1048 = vpop.permute.xlu0 %1047
    %v1049 = vsel %vm79, %v1048, 0
    %1051 = vmatprep.subr.mxu0 %v440
    %1052 = vmatpush1.msra.mxu0 %v439
    %1053 = vmatprep.subr.mxu0 %v442
    %1054 = vmatpush1.msra.mxu0 %v441
    %1055 = vmatprep.subr.mxu0 %v444
    %1056 = vmatpush1.msra.mxu0 %v443
    %1057 = vmatprep.subr.mxu0 %v446
    %1058 = vmatpush1.msra.mxu0 %v445
    %1059 = vmatprep.subr.mxu0 0.0
    %1060 = vmatpush1.msra.mxu0 0.0
    %1061 = vmatprep.subr.mxu0 0.0
    %1062 = vmatpush1.msra.mxu0 0.0
    %1063 = vmatprep.subr.mxu0 0.0
    %1064 = vmatpush1.msra.mxu0 0.0
    %1065 = vmatprep.subr.mxu0 0.0
    %1066 = vmatpush1.msra.mxu0 0.0
    %1067 = vmatprep.subr.mxu0 0.0
    %1068 = vmatpush1.msra.mxu0 0.0
    %1069 = vmatprep.subr.mxu0 0.0
    %1070 = vmatpush1.msra.mxu0 0.0
    %1071 = vmatprep.subr.mxu0 0.0
    %1072 = vmatpush1.msra.mxu0 0.0
    %1073 = vmatprep.subr.mxu0 0.0
    %1074 = vmatpush1.msra.mxu0 0.0
    %1075 = vmatprep.subr.mxu0 0.0
    %1076 = vmatpush1.msra.mxu0 0.0
    %1077 = vmatprep.subr.mxu0 0.0
    %1078 = vmatpush1.msra.mxu0 0.0
    %1079 = vmatprep.subr.mxu0 0.0
    %1080 = vmatpush1.msra.mxu0 0.0
    %1081 = vmatprep.subr.mxu0 0.0
    %1082 = vmatpush1.msra.mxu0 0.0
    %1083 = vmatprep.subr.mxu0 0.0
    %1084 = vmatpush1.msra.mxu0 0.0
    %1085 = vmatprep.subr.mxu0 0.0
    %1086 = vmatpush1.msra.mxu0 0.0
    %1087 = vmatprep.subr.mxu0 0.0
    %1088 = vmatpush1.msra.mxu0 0.0
    %1089 = vmatprep.subr.mxu0 0.0
    %1090 = vmatpush1.msra.mxu0 0.0
    %1091 = vmatprep.subr.mxu0 0.0
    %1092 = vmatpush1.msra.mxu0 0.0
    %1093 = vmatprep.subr.mxu0 0.0
    %1094 = vmatpush1.msra.mxu0 0.0
    %1095 = vmatprep.subr.mxu0 0.0
    %1096 = vmatpush1.msra.mxu0 0.0
    %1097 = vmatprep.subr.mxu0 0.0
    %1098 = vmatpush1.msra.mxu0 0.0
    %1099 = vmatprep.subr.mxu0 0.0
    %1100 = vmatpush1.msra.mxu0 0.0
    %1101 = vmatprep.subr.mxu0 0.0
    %1102 = vmatpush1.msra.mxu0 0.0
    %1103 = vmatprep.subr.mxu0 0.0
    %1104 = vmatpush1.msra.mxu0 0.0
    %1105 = vmatprep.subr.mxu0 0.0
    %1106 = vmatpush1.msra.mxu0 0.0
    %1107 = vmatprep.subr.mxu0 0.0
    %1108 = vmatpush1.msra.mxu0 0.0
    %1109 = vmatprep.subr.mxu0 0.0
    %1110 = vmatpush1.msra.mxu0 0.0
    %1111 = vmatprep.subr.mxu0 0.0
    %1112 = vmatpush1.msra.mxu0 0.0
    %1113 = vmatprep.subr.mxu0 0.0
    %1114 = vmatpush1.msra.mxu0 0.0
    %1115 = vmatprep.mubr.f32.mxu0 0.0
    %1116 = vmatmul.mubr.f32.gmra.mrb[0].mxu0 %v1049
    %v1117 = vpop.f32.mrb[0].mxu0
    %v1118 = vadd.f32 0.0, %v1117
    %v1119 = vpop.f32.mrb[0].mxu0
    %v1120 = vadd.f32 0.0, %v1119
    %1121 = vdwg.mxu0
    %v1122 = vsel %vm525, %v1118, %v1120
    %v1123 = vadd.f32 %v1122, %v433
    %v1124 = vxor.u32 %v1123, 2147483648
    %v1125 = vmul.f32 %v1124, 1.442695
    %v1126 = vpow.pop %v1125
    %v1127 = vadd.f32 %v1126, 1.0
    %v1128 = vrcp.pop %v1127
    %v1129 = vmul.f32 1.0, %v1128
    %v1130 = vmul.f32 %v1129, 2.0
    %v1131 = vsub.f32 %v1130, 1.0
    %v1132 = vmul.f32 %v1129, %v1039
    %1134 = vrot.lane.b32.xlu0 %v1131, 64
    %v1135 = vpop.permute.xlu0 %1134
    %v1137 = vmul.f32 %v1129, %v1135
    %1139 = vrot.lane.b32.xlu0 %v1137, 32
    %v1140 = vpop.permute.xlu0 %1139
    %v1142 = vadd.f32 %v1132, %v1140
    %v1143 = vtanh.pop %v1142
    %1145 = vrot.lane.b32.xlu0 %v1143, 64
    %v1146 = vpop.permute.xlu0 %1145
    %v1148 = vmul.f32 %v1129, %v1146
    %v1149 = vsel %vm438, 5, 2
    %vm1150 = vcmp.lt.s32.totalorder %v1149, %v436
    %vm1151 = vcmp.eq.s32.totalorder %v1149, %v555
    %v1152 = vsel %vm1150, 1, 0
    %1153 = vset.pattern.permute.xlu0 0
    %1154 = vperm.xlu0 %1153, %v1152
    %v1155 = vpop.permute.xlu0 %1154
    %vm1156 = vcmp.eq.s32.totalorder %v1155, 1
    %v1157 = vsel %vm1156, %v1148, %v1038
    %v1158 = vsel %vm1156, %v1142, %v1039
    %v1159 = vsel %vm1151, 1, 0
    %1160 = vset.pattern.permute.xlu0 0
    %1161 = vperm.xlu0 %1160, %v1159
    %v1162 = vpop.permute.xlu0 %1161
    %vm1163 = vcmp.eq.s32.totalorder %v1162, 1
    %v1164 = vsel %vm1163, %v1148, %v1045
    %1166 = vrot.lane.b32.xlu0 %v1157, 32
    %v1167 = vpop.permute.xlu0 %1166
    %v1168 = vsel %vm79, %v1167, 0
    %1170 = vmatprep.subr.mxu0 %v440
    %1171 = vmatpush1.msra.mxu0 %v439
    %1172 = vmatprep.subr.mxu0 %v442
    %1173 = vmatpush1.msra.mxu0 %v441
    %1174 = vmatprep.subr.mxu0 %v444
    %1175 = vmatpush1.msra.mxu0 %v443
    %1176 = vmatprep.subr.mxu0 %v446
    %1177 = vmatpush1.msra.mxu0 %v445
    %1178 = vmatprep.subr.mxu0 0.0
    %1179 = vmatpush1.msra.mxu0 0.0
    %1180 = vmatprep.subr.mxu0 0.0
    %1181 = vmatpush1.msra.mxu0 0.0
    %1182 = vmatprep.subr.mxu0 0.0
    %1183 = vmatpush1.msra.mxu0 0.0
    %1184 = vmatprep.subr.mxu0 0.0
    %1185 = vmatpush1.msra.mxu0 0.0
    %1186 = vmatprep.subr.mxu0 0.0
    %1187 = vmatpush1.msra.mxu0 0.0
    %1188 = vmatprep.subr.mxu0 0.0
    %1189 = vmatpush1.msra.mxu0 0.0
    %1190 = vmatprep.subr.mxu0 0.0
    %1191 = vmatpush1.msra.mxu0 0.0
    %1192 = vmatprep.subr.mxu0 0.0
    %1193 = vmatpush1.msra.mxu0 0.0
    %1194 = vmatprep.subr.mxu0 0.0
    %1195 = vmatpush1.msra.mxu0 0.0
    %1196 = vmatprep.subr.mxu0 0.0
    %1197 = vmatpush1.msra.mxu0 0.0
    %1198 = vmatprep.subr.mxu0 0.0
    %1199 = vmatpush1.msra.mxu0 0.0
    %1200 = vmatprep.subr.mxu0 0.0
    %1201 = vmatpush1.msra.mxu0 0.0
    %1202 = vmatprep.subr.mxu0 0.0
    %1203 = vmatpush1.msra.mxu0 0.0
    %1204 = vmatprep.subr.mxu0 0.0
    %1205 = vmatpush1.msra.mxu0 0.0
    %1206 = vmatprep.subr.mxu0 0.0
    %1207 = vmatpush1.msra.mxu0 0.0
    %1208 = vmatprep.subr.mxu0 0.0
    %1209 = vmatpush1.msra.mxu0 0.0
    %1210 = vmatprep.subr.mxu0 0.0
    %1211 = vmatpush1.msra.mxu0 0.0
    %1212 = vmatprep.subr.mxu0 0.0
    %1213 = vmatpush1.msra.mxu0 0.0
    %1214 = vmatprep.subr.mxu0 0.0
    %1215 = vmatpush1.msra.mxu0 0.0
    %1216 = vmatprep.subr.mxu0 0.0
    %1217 = vmatpush1.msra.mxu0 0.0
    %1218 = vmatprep.subr.mxu0 0.0
    %1219 = vmatpush1.msra.mxu0 0.0
    %1220 = vmatprep.subr.mxu0 0.0
    %1221 = vmatpush1.msra.mxu0 0.0
    %1222 = vmatprep.subr.mxu0 0.0
    %1223 = vmatpush1.msra.mxu0 0.0
    %1224 = vmatprep.subr.mxu0 0.0
    %1225 = vmatpush1.msra.mxu0 0.0
    %1226 = vmatprep.subr.mxu0 0.0
    %1227 = vmatpush1.msra.mxu0 0.0
    %1228 = vmatprep.subr.mxu0 0.0
    %1229 = vmatpush1.msra.mxu0 0.0
    %1230 = vmatprep.subr.mxu0 0.0
    %1231 = vmatpush1.msra.mxu0 0.0
    %1232 = vmatprep.subr.mxu0 0.0
    %1233 = vmatpush1.msra.mxu0 0.0
    %1234 = vmatprep.mubr.f32.mxu0 0.0
    %1235 = vmatmul.mubr.f32.gmra.mrb[0].mxu0 %v1168
    %v1236 = vpop.f32.mrb[0].mxu0
    %v1237 = vadd.f32 0.0, %v1236
    %v1238 = vpop.f32.mrb[0].mxu0
    %v1239 = vadd.f32 0.0, %v1238
    %1240 = vdwg.mxu0
    %v1241 = vsel %vm525, %v1237, %v1239
    %v1242 = vadd.f32 %v1241, %v434
    %v1243 = vxor.u32 %v1242, 2147483648
    %v1244 = vmul.f32 %v1243, 1.442695
    %v1245 = vpow.pop %v1244
    %v1246 = vadd.f32 %v1245, 1.0
    %v1247 = vrcp.pop %v1246
    %v1248 = vmul.f32 1.0, %v1247
    %v1249 = vmul.f32 %v1248, 2.0
    %v1250 = vsub.f32 %v1249, 1.0
    %v1251 = vmul.f32 %v1248, %v1158
    %1253 = vrot.lane.b32.xlu0 %v1250, 64
    %v1254 = vpop.permute.xlu0 %1253
    %v1256 = vmul.f32 %v1248, %v1254
    %1258 = vrot.lane.b32.xlu0 %v1256, 32
    %v1259 = vpop.permute.xlu0 %1258
    %v1261 = vadd.f32 %v1251, %v1259
    %v1262 = vtanh.pop %v1261
    %1264 = vrot.lane.b32.xlu0 %v1262, 64
    %v1265 = vpop.permute.xlu0 %1264
    %v1267 = vmul.f32 %v1248, %v1265
    %v1268 = vsel %vm438, 6, 1
    %vm1269 = vcmp.lt.s32.totalorder %v1268, %v436
    %vm1270 = vcmp.eq.s32.totalorder %v1268, %v555
    %v1271 = vsel %vm1269, 1, 0
    %1272 = vset.pattern.permute.xlu0 0
    %1273 = vperm.xlu0 %1272, %v1271
    %v1274 = vpop.permute.xlu0 %1273
    %vm1275 = vcmp.eq.s32.totalorder %v1274, 1
    %v1276 = vsel %vm1275, %v1267, %v1157
    %v1277 = vsel %vm1275, %v1261, %v1158
    %v1278 = vsel %vm1270, 1, 0
    %1279 = vset.pattern.permute.xlu0 0
    %1280 = vperm.xlu0 %1279, %v1278
    %v1281 = vpop.permute.xlu0 %1280
    %vm1282 = vcmp.eq.s32.totalorder %v1281, 1
    %v1283 = vsel %vm1282, %v1267, %v1164
    %1285 = vrot.lane.b32.xlu0 %v1276, 32
    %v1286 = vpop.permute.xlu0 %1285
    %v1287 = vsel %vm79, %v1286, 0
    %1289 = vmatprep.subr.mxu0 %v440
    %1290 = vmatpush1.msra.mxu0 %v439
    %1291 = vmatprep.subr.mxu0 %v442
    %1292 = vmatpush1.msra.mxu0 %v441
    %1293 = vmatprep.subr.mxu0 %v444
    %1294 = vmatpush1.msra.mxu0 %v443
    %1295 = vmatprep.subr.mxu0 %v446
    %1296 = vmatpush1.msra.mxu0 %v445
    %1297 = vmatprep.subr.mxu0 0.0
    %1298 = vmatpush1.msra.mxu0 0.0
    %1299 = vmatprep.subr.mxu0 0.0
    %1300 = vmatpush1.msra.mxu0 0.0
    %1301 = vmatprep.subr.mxu0 0.0
    %1302 = vmatpush1.msra.mxu0 0.0
    %1303 = vmatprep.subr.mxu0 0.0
    %1304 = vmatpush1.msra.mxu0 0.0
    %1305 = vmatprep.subr.mxu0 0.0
    %1306 = vmatpush1.msra.mxu0 0.0
    %1307 = vmatprep.subr.mxu0 0.0
    %1308 = vmatpush1.msra.mxu0 0.0
    %1309 = vmatprep.subr.mxu0 0.0
    %1310 = vmatpush1.msra.mxu0 0.0
    %1311 = vmatprep.subr.mxu0 0.0
    %1312 = vmatpush1.msra.mxu0 0.0
    %1313 = vmatprep.subr.mxu0 0.0
    %1314 = vmatpush1.msra.mxu0 0.0
    %1315 = vmatprep.subr.mxu0 0.0
    %1316 = vmatpush1.msra.mxu0 0.0
    %1317 = vmatprep.subr.mxu0 0.0
    %1318 = vmatpush1.msra.mxu0 0.0
    %1319 = vmatprep.subr.mxu0 0.0
    %1320 = vmatpush1.msra.mxu0 0.0
    %1321 = vmatprep.subr.mxu0 0.0
    %1322 = vmatpush1.msra.mxu0 0.0
    %1323 = vmatprep.subr.mxu0 0.0
    %1324 = vmatpush1.msra.mxu0 0.0
    %1325 = vmatprep.subr.mxu0 0.0
    %1326 = vmatpush1.msra.mxu0 0.0
    %1327 = vmatprep.subr.mxu0 0.0
    %1328 = vmatpush1.msra.mxu0 0.0
    %1329 = vmatprep.subr.mxu0 0.0
    %1330 = vmatpush1.msra.mxu0 0.0
    %1331 = vmatprep.subr.mxu0 0.0
    %1332 = vmatpush1.msra.mxu0 0.0
    %1333 = vmatprep.subr.mxu0 0.0
    %1334 = vmatpush1.msra.mxu0 0.0
    %1335 = vmatprep.subr.mxu0 0.0
    %1336 = vmatpush1.msra.mxu0 0.0
    %1337 = vmatprep.subr.mxu0 0.0
    %1338 = vmatpush1.msra.mxu0 0.0
    %1339 = vmatprep.subr.mxu0 0.0
    %1340 = vmatpush1.msra.mxu0 0.0
    %1341 = vmatprep.subr.mxu0 0.0
    %1342 = vmatpush1.msra.mxu0 0.0
    %1343 = vmatprep.subr.mxu0 0.0
    %1344 = vmatpush1.msra.mxu0 0.0
    %1345 = vmatprep.subr.mxu0 0.0
    %1346 = vmatpush1.msra.mxu0 0.0
    %1347 = vmatprep.subr.mxu0 0.0
    %1348 = vmatpush1.msra.mxu0 0.0
    %1349 = vmatprep.subr.mxu0 0.0
    %1350 = vmatpush1.msra.mxu0 0.0
    %1351 = vmatprep.subr.mxu0 0.0
    %1352 = vmatpush1.msra.mxu0 0.0
    %1353 = vmatprep.mubr.f32.mxu0 0.0
    %1354 = vmatmul.mubr.f32.gmra.mrb[0].mxu0 %v1287
    %v1355 = vpop.f32.mrb[0].mxu0
    %v1356 = vadd.f32 0.0, %v1355
    %v1357 = vpop.f32.mrb[0].mxu0
    %v1358 = vadd.f32 0.0, %v1357
    %1359 = vdwg.mxu0
    %v1360 = vsel %vm525, %v1356, %v1358
    %v1361 = vadd.f32 %v1360, %v435
    %v1362 = vxor.u32 %v1361, 2147483648
    %v1363 = vmul.f32 %v1362, 1.442695
    %v1364 = vpow.pop %v1363
    %v1365 = vadd.f32 %v1364, 1.0
    %v1366 = vrcp.pop %v1365
    %v1367 = vmul.f32 1.0, %v1366
    %v1368 = vmul.f32 %v1367, 2.0
    %v1369 = vsub.f32 %v1368, 1.0
    %v1370 = vmul.f32 %v1367, %v1277
    %1372 = vrot.lane.b32.xlu0 %v1369, 64
    %v1373 = vpop.permute.xlu0 %1372
    %v1375 = vmul.f32 %v1367, %v1373
    %1377 = vrot.lane.b32.xlu0 %v1375, 32
    %v1378 = vpop.permute.xlu0 %1377
    %v1380 = vadd.f32 %v1370, %v1378
    %v1381 = vtanh.pop %v1380
    %1383 = vrot.lane.b32.xlu0 %v1381, 64
    %v1384 = vpop.permute.xlu0 %1383
    %v1386 = vmul.f32 %v1367, %v1384
    %v1387 = vsel %vm438, 7, 0
    %vm1388 = vcmp.eq.s32.totalorder %v1387, %v555
    %v1389 = vsel %vm1388, 1, 0
    %1390 = vset.pattern.permute.xlu0 0
    %1391 = vperm.xlu0 %1390, %v1389
    %v1392 = vpop.permute.xlu0 %1391
    %vm1393 = vcmp.eq.s32.totalorder %v1392, 1
    %v1394 = vsel %vm1393, %v1386, %v1283
    %v1395 = vld [vmem:[%s8] sm:$0xff]
    %v1396 = vld [vmem:[%s8 + $0x8] sm:$0xff]
    %v1397 = vld [vmem:[%s8 + $0x10] sm:$0xff]
    %v1398 = vld [vmem:[%s8 + $0x18] sm:$0xff]
    %v1399 = vld [vmem:[%s8 + $0x20] sm:$0xff]
    %v1400 = vld [vmem:[%s8 + $0x28] sm:$0xff]
    %v1401 = vld [vmem:[%s8 + $0x30] sm:$0xff]
    %v1402 = vld [vmem:[%s8 + $0x38] sm:$0xff]
    %1404 = vrot.lane.b32.xlu0 %v1394, 32
    %v1405 = vpop.permute.xlu0 %1404
    %v1406 = vsel %vm79, %v1405, 0
    %1408 = vmatprep.subr.mxu0 0.0
    %1409 = vmatpush1.msra.mxu0 %v1399
    %1410 = vmatprep.subr.mxu0 0.0
    %1411 = vmatpush1.msra.mxu0 %v1400
    %1412 = vmatprep.subr.mxu0 0.0
    %1413 = vmatpush1.msra.mxu0 %v1401
    %1414 = vmatprep.subr.mxu0 0.0
    %1415 = vmatpush1.msra.mxu0 %v1402
    %1416 = vmatprep.subr.mxu0 0.0
    %1417 = vmatpush1.msra.mxu0 0.0
    %1418 = vmatprep.subr.mxu0 0.0
    %1419 = vmatpush1.msra.mxu0 0.0
    %1420 = vmatprep.subr.mxu0 0.0
    %1421 = vmatpush1.msra.mxu0 0.0
    %1422 = vmatprep.subr.mxu0 0.0
    %1423 = vmatpush1.msra.mxu0 0.0
    %1424 = vmatprep.subr.mxu0 0.0
    %1425 = vmatpush1.msra.mxu0 0.0
    %1426 = vmatprep.subr.mxu0 0.0
    %1427 = vmatpush1.msra.mxu0 0.0
    %1428 = vmatprep.subr.mxu0 0.0
    %1429 = vmatpush1.msra.mxu0 0.0
    %1430 = vmatprep.subr.mxu0 0.0
    %1431 = vmatpush1.msra.mxu0 0.0
    %1432 = vmatprep.subr.mxu0 0.0
    %1433 = vmatpush1.msra.mxu0 0.0
    %1434 = vmatprep.subr.mxu0 0.0
    %1435 = vmatpush1.msra.mxu0 0.0
    %1436 = vmatprep.subr.mxu0 0.0
    %1437 = vmatpush1.msra.mxu0 0.0
    %1438 = vmatprep.subr.mxu0 0.0
    %1439 = vmatpush1.msra.mxu0 0.0
    %1440 = vmatprep.subr.mxu0 0.0
    %1441 = vmatpush1.msra.mxu0 0.0
    %1442 = vmatprep.subr.mxu0 0.0
    %1443 = vmatpush1.msra.mxu0 0.0
    %1444 = vmatprep.subr.mxu0 0.0
    %1445 = vmatpush1.msra.mxu0 0.0
    %1446 = vmatprep.subr.mxu0 0.0
    %1447 = vmatpush1.msra.mxu0 0.0
    %1448 = vmatprep.subr.mxu0 0.0
    %1449 = vmatpush1.msra.mxu0 0.0
    %1450 = vmatprep.subr.mxu0 0.0
    %1451 = vmatpush1.msra.mxu0 0.0
    %1452 = vmatprep.subr.mxu0 0.0
    %1453 = vmatpush1.msra.mxu0 0.0
    %1454 = vmatprep.subr.mxu0 0.0
    %1455 = vmatpush1.msra.mxu0 0.0
    %1456 = vmatprep.subr.mxu0 0.0
    %1457 = vmatpush1.msra.mxu0 0.0
    %1458 = vmatprep.subr.mxu0 0.0
    %1459 = vmatpush1.msra.mxu0 0.0
    %1460 = vmatprep.subr.mxu0 0.0
    %1461 = vmatpush1.msra.mxu0 0.0
    %1462 = vmatprep.subr.mxu0 0.0
    %1463 = vmatpush1.msra.mxu0 0.0
    %1464 = vmatprep.subr.mxu0 0.0
    %1465 = vmatpush1.msra.mxu0 0.0
    %1466 = vmatprep.subr.mxu0 0.0
    %1467 = vmatpush1.msra.mxu0 0.0
    %1468 = vmatprep.subr.mxu0 0.0
    %1469 = vmatpush1.msra.mxu0 0.0
    %1470 = vmatprep.subr.mxu0 0.0
    %1471 = vmatpush1.msra.mxu0 0.0
    %1472 = vmatprep.mubr.f32.mxu0 0.0
    %1473 = vmatmul.mubr.f32.gmra.mrb[0].mxu0 %v1406
    %v1474 = vpop.f32.mrb[0].mxu0
    %v1475 = vadd.f32 0.0, %v1474
    %v1476 = vpop.f32.mrb[0].mxu0
    %1477 = vdwg.mxu0
    %v1478 = vrot.slane %v1475, 4
    %1479 = vmatprep.subr.mxu0 0.0
    %1480 = vmatpush1.msra.mxu0 %v1395
    %1481 = vmatprep.subr.mxu0 0.0
    %1482 = vmatpush1.msra.mxu0 %v1396
    %1483 = vmatprep.subr.mxu0 0.0
    %1484 = vmatpush1.msra.mxu0 %v1397
    %1485 = vmatprep.subr.mxu0 0.0
    %1486 = vmatpush1.msra.mxu0 %v1398
    %1487 = vmatprep.subr.mxu0 0.0
    %1488 = vmatpush1.msra.mxu0 0.0
    %1489 = vmatprep.subr.mxu0 0.0
    %1490 = vmatpush1.msra.mxu0 0.0
    %1491 = vmatprep.subr.mxu0 0.0
    %1492 = vmatpush1.msra.mxu0 0.0
    %1493 = vmatprep.subr.mxu0 0.0
    %1494 = vmatpush1.msra.mxu0 0.0
    %1495 = vmatprep.subr.mxu0 0.0
    %1496 = vmatpush1.msra.mxu0 0.0
    %1497 = vmatprep.subr.mxu0 0.0
    %1498 = vmatpush1.msra.mxu0 0.0
    %1499 = vmatprep.subr.mxu0 0.0
    %1500 = vmatpush1.msra.mxu0 0.0
    %1501 = vmatprep.subr.mxu0 0.0
    %1502 = vmatpush1.msra.mxu0 0.0
    %1503 = vmatprep.subr.mxu0 0.0
    %1504 = vmatpush1.msra.mxu0 0.0
    %1505 = vmatprep.subr.mxu0 0.0
    %1506 = vmatpush1.msra.mxu0 0.0
    %1507 = vmatprep.subr.mxu0 0.0
    %1508 = vmatpush1.msra.mxu0 0.0
    %1509 = vmatprep.subr.mxu0 0.0
    %1510 = vmatpush1.msra.mxu0 0.0
    %1511 = vmatprep.subr.mxu0 0.0
    %1512 = vmatpush1.msra.mxu0 0.0
    %1513 = vmatprep.subr.mxu0 0.0
    %1514 = vmatpush1.msra.mxu0 0.0
    %1515 = vmatprep.subr.mxu0 0.0
    %1516 = vmatpush1.msra.mxu0 0.0
    %1517 = vmatprep.subr.mxu0 0.0
    %1518 = vmatpush1.msra.mxu0 0.0
    %1519 = vmatprep.subr.mxu0 0.0
    %1520 = vmatpush1.msra.mxu0 0.0
    %1521 = vmatprep.subr.mxu0 0.0
    %1522 = vmatpush1.msra.mxu0 0.0
    %1523 = vmatprep.subr.mxu0 0.0
    %1524 = vmatpush1.msra.mxu0 0.0
    %1525 = vmatprep.subr.mxu0 0.0
    %1526 = vmatpush1.msra.mxu0 0.0
    %1527 = vmatprep.subr.mxu0 0.0
    %1528 = vmatpush1.msra.mxu0 0.0
    %1529 = vmatprep.subr.mxu0 0.0
    %1530 = vmatpush1.msra.mxu0 0.0
    %1531 = vmatprep.subr.mxu0 0.0
    %1532 = vmatpush1.msra.mxu0 0.0
    %1533 = vmatprep.subr.mxu0 0.0
    %1534 = vmatpush1.msra.mxu0 0.0
    %1535 = vmatprep.subr.mxu0 0.0
    %1536 = vmatpush1.msra.mxu0 0.0
    %1537 = vmatprep.subr.mxu0 0.0
    %1538 = vmatpush1.msra.mxu0 0.0
    %1539 = vmatprep.subr.mxu0 0.0
    %1540 = vmatpush1.msra.mxu0 0.0
    %1541 = vmatprep.subr.mxu0 0.0
    %1542 = vmatpush1.msra.mxu0 0.0
    %1543 = vmatprep.mubr.f32.mxu0 0.0
    %1544 = vmatmul.mubr.f32.gmra.mrb[0].mxu0 %v1406
    %v1545 = vpop.f32.mrb[0].mxu0
    %v1546 = vadd.f32 %v1478, %v1545
    %v1547 = vpop.f32.mrb[0].mxu0
    %1548 = vdwg.mxu0
    %v1549 = vld [vmem:[%s9] sm:$0x1]
    %v1551 = vlaneseq
    %v1552 = vshrl.u32 %v1551, 7
    %v1553 = vsub.s32 0, %v1552
    %v1554 = vrot.slane %v1549, %v1553
    %v1556 = vadd.f32 %v1546, %v1554
    %1557 = vst [vmem:[#allocation8] sm:$0xff] %v1556
    // Predicated region
    $region54: #{tpu_custom_call.1} parent=1 // pred_check
      _
    $region55: #{tpu_custom_call.1} parent=1 // pred_check_branch
      %1559 = sbr.rel (0) target = $region57
    $region56: #{tpu_custom_call.1} parent=1 // pred_region
      %s1561 = ssub.s32 128, 128
      %1562 = vsyncadd [#allocation4], %s1561
      %s1564 = sshll.u32 [#allocation8], 4
      %s1565 = int_to_ptr.vmem [resolvable:$true] %s1564
      %1567 = dma.vmem_to_hbm [thread:$0]  %s1565, 128, %s10, [#allocation4]
    $region57: #{tpu_custom_call.1} parent=1 // pred_fallthru
      _
    // Predicated region
    $region58: #{tpu_custom_call.1} parent=1 // pred_check
      _
    $region59: #{tpu_custom_call.1} parent=1 // pred_check_branch
      %1569 = sbr.rel (0) target = $region61
    $region60: #{tpu_custom_call.1} parent=1 // pred_region
      %1570 = dma.done [#allocation4], 128
    $region61: #{tpu_custom_call.1} parent=1 // pred_fallthru
      _
    %1571 = vsyncpa [#allocation3], 1
    %1572 = vsyncpa [#allocation6], 1
    %1573 = vsyncpa [#allocation4], 1

</llo_original>
